<compile_context>
chip_gen: v7x
topology: tpu7x:2x2x1
jax: 0.10.0
libtpu: 0.0.40
codegen_flags: <defaults>
</compile_context>

<pallas_src>
import functools

import jax
import jax.numpy as jnp
from jax import lax
from jax.experimental import pallas as pl
from jax.experimental.pallas import tpu as pltpu

LANE = 128   # feature axes padded to this (lane-dense stores, full MXU N fill)
K_PAD = 32   # contraction axis (9*C) padded to a bf16-friendly multiple


def _round_up(n, m):
    return (n + m - 1) // m * m


# ------------- Fused kernel: conv3x3 (one K=27 matmul per frame) + bias + ReLU
# -------------                + spatial & temporal mean + FC + bias -----------------

def _fused_kernel(p_ref, wc_ref, bc_ref, wf_ref, bf_ref, o_ref, *, T, HW):
    """One video (T frames) -> one feature row.

    p_ref : (T*HW, Kp)  bf16  im2col patch rows (frame-major)
    wc_ref: (Kp, CFp)   bf16  conv weights, 3x3 taps concatenated on the K axis
    bc_ref: (1, CFp)    f32   conv bias
    wf_ref: (CFp, FDp)  bf16  FC weights
    bf_ref: (1, FDp)    f32   FC bias
    o_ref : (1, 1, FDp) f32   output feature row for this video
    """
    cfp = wc_ref.shape[-1]
    inv = 1.0 / (T * HW)          # hoisted reciprocal: sum * inv, no per-element divide

    def frame(t, acc):
        # One 256-row chunk (= one frame): single K=27 dot, bias+ReLU, sublane reduce.
        r0 = pl.multiple_of(t * HW, HW)
        xs = p_ref[pl.ds(r0, HW), :]                               # (HW, Kp) bf16
        conv = jnp.dot(xs, wc_ref[...],
                       preferred_element_type=jnp.float32)         # (HW, CFp) f32
        conv = jnp.maximum(conv + bc_ref[...], 0.0)                # bias + ReLU
        return acc + jnp.sum(conv, axis=0, keepdims=True)          # (1, CFp)

    acc = lax.fori_loop(0, T, frame, jnp.zeros((1, cfp), jnp.float32),
                        unroll=True)
    pooled = (acc * inv).astype(wf_ref.dtype)                      # mean over T*H*W
    feat = jnp.dot(pooled, wf_ref[...],
                   preferred_element_type=jnp.float32) + bf_ref[...]
    o_ref[...] = feat.reshape(o_ref.shape).astype(o_ref.dtype)


def fused_forward(patches, wc, bc, wf, bfc, *, NB, T, HW):
    """patches: (NB*T*HW, Kp) bf16 -> (NB, 1, FDp) f32 features (lane-padded)."""
    rows = T * HW
    assert rows % 8 == 0, "per-video row block must be a multiple of 8 sublanes"
    Kp = patches.shape[-1]
    CFp = wc.shape[-1]
    FDp = wf.shape[-1]
    kernel = functools.partial(_fused_kernel, T=T, HW=HW)
    return pl.pallas_call(
        kernel,
        out_shape=jax.ShapeDtypeStruct((NB, 1, FDp), jnp.float32),
        grid=(NB,),
        in_specs=[
            pl.BlockSpec((rows, Kp), lambda i: (i, 0)),    # per-video patch rows
            pl.BlockSpec((Kp, CFp), lambda i: (0, 0)),     # conv weights (resident)
            pl.BlockSpec((1, CFp), lambda i: (0, 0)),      # conv bias
            pl.BlockSpec((CFp, FDp), lambda i: (0, 0)),    # FC weights
            pl.BlockSpec((1, FDp), lambda i: (0, 0)),      # FC bias
        ],
        out_specs=pl.BlockSpec((1, 1, FDp), lambda i: (i, 0, 0)),
        compiler_params=pltpu.CompilerParams(
            dimension_semantics=("parallel",)),
    )(patches, wc, bc, wf, bfc)


# ----------------------------------- JAX glue ---------------------------------------

def init_params(key, c_in, c_feat, feat_dim):
    """Deterministic weights in PyTorch layouts (conv OIHW, linear (out, in))."""
    k1, k2, k3, k4 = jax.random.split(key, 4)
    conv_w = 0.1 * jax.random.normal(k1, (c_feat, c_in, 3, 3), jnp.float32)
    conv_b = 0.01 * jax.random.normal(k2, (c_feat,), jnp.float32)
    fc_w = 0.1 * jax.random.normal(k3, (feat_dim, c_feat), jnp.float32)
    fc_b = 0.01 * jax.random.normal(k4, (feat_dim,), jnp.float32)
    return {"conv_w": conv_w, "conv_b": conv_b, "fc_w": fc_w, "fc_b": fc_b}


def _pack_params(params):
    """PyTorch layouts -> kernel layouts: taps onto the K axis, lane-padded features."""
    conv_w, conv_b = params["conv_w"], params["conv_b"]      # (CF, C, 3, 3), (CF,)
    fc_w, fc_b = params["fc_w"], params["fc_b"]              # (FD, CF), (FD,)
    CF, C = conv_w.shape[0], conv_w.shape[1]
    FD = fc_w.shape[0]
    K = 9 * C
    Kp = _round_up(K, K_PAD)
    CFp, FDp = _round_up(CF, LANE), _round_up(FD, LANE)
    # (CF, C, 3, 3) -> (3, 3, C, CF) -> (9*C, CF): row k = (dy*3 + dx)*C + c.
    wc = jnp.transpose(conv_w, (2, 3, 1, 0)).reshape(K, CF)
    wc = jnp.pad(wc, ((0, Kp - K), (0, CFp - CF))).astype(jnp.bfloat16)
    bc = jnp.pad(conv_b, (0, CFp - CF)).reshape(1, CFp).astype(jnp.float32)
    wf = jnp.pad(fc_w.T, ((0, CFp - CF), (0, FDp - FD))).astype(jnp.bfloat16)
    bf_ = jnp.pad(fc_b, (0, FDp - FD)).reshape(1, FDp).astype(jnp.float32)
    return wc, bc, wf, bf_, FD, Kp


def cnn2d_forward(x, params):
    """Forward: x is (B0, B1, T, C, H, W), returns {'x': (B0*B1, featDim)}."""
    B0, B1, T, C, H, W = x.shape
    N = B0 * B1 * T
    NB = B0 * B1
    wc, bc, wf, bf_, feat_dim, Kp = _pack_params(params)

    # x.view(B0*B1*T, C, H, W) (NCHW) -> NHWC with a 1-pixel halo ('same' conv).
    imgs = jnp.transpose(x.reshape(N, C, H, W), (0, 2, 3, 1))
    xp = jnp.pad(imgs, ((0, 0), (1, 1), (1, 1), (0, 0)))
    # Wrapper-side im2col: 9 taps concatenated on the channel axis (dy outer, dx inner,
    # matching the weight slab), flattened to a lane-dense (N*H*W, Kp) bf16 matrix.
    patches = jnp.concatenate(
        [xp[:, dy:dy + H, dx:dx + W, :] for dy in range(3) for dx in range(3)],
        axis=-1)
    patches = patches.reshape(N * H * W, 9 * C)
    patches = jnp.pad(patches, ((0, 0), (0, Kp - 9 * C))).astype(jnp.bfloat16)

    feat = fused_forward(patches, wc, bc, wf, bf_, NB=NB, T=T, HW=H * W)
    return {"x": feat[:, 0, :feat_dim]}        # drop singleton dim + lane padding


def _reference(x, params):
    """Pure-JAX f32 reference with the ORIGINAL op order (FC per frame, then temporal mean)."""
    B0, B1, T, C, H, W = x.shape
    N = B0 * B1 * T
    imgs = jnp.transpose(x.reshape(N, C, H, W), (0, 2, 3, 1))
    hwio = jnp.transpose(params["conv_w"], (2, 3, 1, 0))
    conv = jax.lax.conv_general_dilated(
        imgs, hwio, window_strides=(1, 1), padding="SAME",
        dimension_numbers=("NHWC", "HWIO", "NHWC"))
    conv = jax.nn.relu(conv + params["conv_b"])
    pooled = conv.mean(axis=(1, 2))
    feat = pooled @ params["fc_w"].T + params["fc_b"]
    return feat.reshape(B0 * B1, T, -1).mean(axis=1)


# ------------------------------------- main -----------------------------------------

if __name__ == "__main__":
    B0, B1, T, C, H, W = 2, 2, 4, 3, 16, 16
    C_FEAT, FEAT_DIM = 32, 64

    key = jax.random.PRNGKey(0)
    kx, kp = jax.random.split(key)
    x = jax.random.normal(kx, (B0, B1, T, C, H, W), jnp.float32)
    params = init_params(kp, C, C_FEAT, FEAT_DIM)

    out = jax.jit(cnn2d_forward)(x, params)
    feat = jax.block_until_ready(out["x"])
    assert feat.shape == (B0 * B1, FEAT_DIM), feat.shape
    assert feat.dtype == jnp.float32
    assert bool(jnp.all(jnp.isfinite(feat)))

    ref = _reference(x, params)
    err = float(jnp.max(jnp.abs(feat - ref)))
    assert err < 5e-2, f"max abs err vs reference: {err}"

    print("KERNEL_OK")
</pallas_src>

<mosaic_0001>
module attributes {stable_mosaic.version = 11 : i64} {
  func.func @_fused_kernel(%arg0: i32, %arg1: memref<1024x32xbf16, #tpu.memory_space<vmem>>, %arg2: memref<32x128xbf16, #tpu.memory_space<vmem>>, %arg3: memref<1x128xf32, #tpu.memory_space<vmem>>, %arg4: memref<128x128xbf16, #tpu.memory_space<vmem>>, %arg5: memref<1x128xf32, #tpu.memory_space<vmem>>, %arg6: memref<1x1x128xf32, #tpu.memory_space<vmem>>) attributes {dimension_semantics = [#tpu.dimension_semantics<parallel>], iteration_bounds = array<i64: 4>, scalar_prefetch = 0 : i64, scratch_operands = 0 : i64, tpu.core_type = #tpu.core_type<tc>, window_params = [{transform_indices = @transform_0, window_bounds = array<i64: 1024, 32>}, {pipeline_mode = #tpu.pipeline_mode<synchronous>, transform_indices = @transform_1, window_bounds = array<i64: 32, 128>}, {pipeline_mode = #tpu.pipeline_mode<synchronous>, transform_indices = @transform_2, window_bounds = array<i64: 1, 128>}, {pipeline_mode = #tpu.pipeline_mode<synchronous>, transform_indices = @transform_3, window_bounds = array<i64: 128, 128>}, {pipeline_mode = #tpu.pipeline_mode<synchronous>, transform_indices = @transform_4, window_bounds = array<i64: 1, 128>}, {transform_indices = @transform_5, window_bounds = array<i64: 1, 1, 128>}]} {
    %cst = arith.constant 0.000000e+00 : f32
    %0 = vector.broadcast %cst : f32 to vector<1x128xf32>
    %c0_i32 = arith.constant 0 : i32
    %c256_i32 = arith.constant 256 : i32
    %1 = arith.muli %c0_i32, %c256_i32 : i32
    %2 = tpu.assume_multiple %1, 256 : i32
    %3 = arith.index_cast %2 : i32 to index
    %c0 = arith.constant 0 : index
    %4 = vector.load %arg1[%3, %c0] : memref<1024x32xbf16, #tpu.memory_space<vmem>>, vector<256x32xbf16>
    %c0_0 = arith.constant 0 : index
    %c0_1 = arith.constant 0 : index
    %5 = vector.load %arg2[%c0_0, %c0_1] : memref<32x128xbf16, #tpu.memory_space<vmem>>, vector<32x128xbf16>
    %cst_2 = arith.constant dense<0.000000e+00> : vector<256x128xf32>
    %6 = tpu.matmul %4, %5, %cst_2 {dimension_numbers = #tpu.dot_dimension_numbers<[1], [0], [0], [1], [0, 0, 1, 1], [], []>} : vector<256x32xbf16>, vector<32x128xbf16>, vector<256x128xf32> -> vector<256x128xf32>
    %c0_3 = arith.constant 0 : index
    %c0_4 = arith.constant 0 : index
    %7 = vector.load %arg3[%c0_3, %c0_4] : memref<1x128xf32, #tpu.memory_space<vmem>>, vector<1x128xf32>
    %8 = vector.broadcast %7 : vector<1x128xf32> to vector<256x128xf32>
    %9 = arith.addf %6, %8 : vector<256x128xf32>
    %cst_5 = arith.constant 0.000000e+00 : f32
    %10 = vector.broadcast %cst_5 : f32 to vector<256x128xf32>
    %11 = arith.maximumf %9, %10 : vector<256x128xf32>
    %cst_6 = arith.constant dense<0.000000e+00> : vector<128xf32>
    %12 = vector.multi_reduction <add>, %11, %cst_6 [0] : vector<256x128xf32> to vector<128xf32>
    %13 = vector.shape_cast %12 : vector<128xf32> to vector<1x128xf32>
    %14 = arith.addf %0, %13 : vector<1x128xf32>
    %c1_i32 = arith.constant 1 : i32
    %c256_i32_7 = arith.constant 256 : i32
    %15 = arith.muli %c1_i32, %c256_i32_7 : i32
    %16 = tpu.assume_multiple %15, 256 : i32
    %17 = arith.index_cast %16 : i32 to index
    %c0_8 = arith.constant 0 : index
    %18 = vector.load %arg1[%17, %c0_8] : memref<1024x32xbf16, #tpu.memory_space<vmem>>, vector<256x32xbf16>
    %c0_9 = arith.constant 0 : index
    %c0_10 = arith.constant 0 : index
    %19 = vector.load %arg2[%c0_9, %c0_10] : memref<32x128xbf16, #tpu.memory_space<vmem>>, vector<32x128xbf16>
    %cst_11 = arith.constant dense<0.000000e+00> : vector<256x128xf32>
    %20 = tpu.matmul %18, %19, %cst_11 {dimension_numbers = #tpu.dot_dimension_numbers<[1], [0], [0], [1], [0, 0, 1, 1], [], []>} : vector<256x32xbf16>, vector<32x128xbf16>, vector<256x128xf32> -> vector<256x128xf32>
    %c0_12 = arith.constant 0 : index
    %c0_13 = arith.constant 0 : index
    %21 = vector.load %arg3[%c0_12, %c0_13] : memref<1x128xf32, #tpu.memory_space<vmem>>, vector<1x128xf32>
    %22 = vector.broadcast %21 : vector<1x128xf32> to vector<256x128xf32>
    %23 = arith.addf %20, %22 : vector<256x128xf32>
    %cst_14 = arith.constant 0.000000e+00 : f32
    %24 = vector.broadcast %cst_14 : f32 to vector<256x128xf32>
    %25 = arith.maximumf %23, %24 : vector<256x128xf32>
    %cst_15 = arith.constant dense<0.000000e+00> : vector<128xf32>
    %26 = vector.multi_reduction <add>, %25, %cst_15 [0] : vector<256x128xf32> to vector<128xf32>
    %27 = vector.shape_cast %26 : vector<128xf32> to vector<1x128xf32>
    %28 = arith.addf %14, %27 : vector<1x128xf32>
    %c2_i32 = arith.constant 2 : i32
    %c256_i32_16 = arith.constant 256 : i32
    %29 = arith.muli %c2_i32, %c256_i32_16 : i32
    %30 = tpu.assume_multiple %29, 256 : i32
    %31 = arith.index_cast %30 : i32 to index
    %c0_17 = arith.constant 0 : index
    %32 = vector.load %arg1[%31, %c0_17] : memref<1024x32xbf16, #tpu.memory_space<vmem>>, vector<256x32xbf16>
    %c0_18 = arith.constant 0 : index
    %c0_19 = arith.constant 0 : index
    %33 = vector.load %arg2[%c0_18, %c0_19] : memref<32x128xbf16, #tpu.memory_space<vmem>>, vector<32x128xbf16>
    %cst_20 = arith.constant dense<0.000000e+00> : vector<256x128xf32>
    %34 = tpu.matmul %32, %33, %cst_20 {dimension_numbers = #tpu.dot_dimension_numbers<[1], [0], [0], [1], [0, 0, 1, 1], [], []>} : vector<256x32xbf16>, vector<32x128xbf16>, vector<256x128xf32> -> vector<256x128xf32>
    %c0_21 = arith.constant 0 : index
    %c0_22 = arith.constant 0 : index
    %35 = vector.load %arg3[%c0_21, %c0_22] : memref<1x128xf32, #tpu.memory_space<vmem>>, vector<1x128xf32>
    %36 = vector.broadcast %35 : vector<1x128xf32> to vector<256x128xf32>
    %37 = arith.addf %34, %36 : vector<256x128xf32>
    %cst_23 = arith.constant 0.000000e+00 : f32
    %38 = vector.broadcast %cst_23 : f32 to vector<256x128xf32>
    %39 = arith.maximumf %37, %38 : vector<256x128xf32>
    %cst_24 = arith.constant dense<0.000000e+00> : vector<128xf32>
    %40 = vector.multi_reduction <add>, %39, %cst_24 [0] : vector<256x128xf32> to vector<128xf32>
    %41 = vector.shape_cast %40 : vector<128xf32> to vector<1x128xf32>
    %42 = arith.addf %28, %41 : vector<1x128xf32>
    %c3_i32 = arith.constant 3 : i32
    %c256_i32_25 = arith.constant 256 : i32
    %43 = arith.muli %c3_i32, %c256_i32_25 : i32
    %44 = tpu.assume_multiple %43, 256 : i32
    %45 = arith.index_cast %44 : i32 to index
    %c0_26 = arith.constant 0 : index
    %46 = vector.load %arg1[%45, %c0_26] : memref<1024x32xbf16, #tpu.memory_space<vmem>>, vector<256x32xbf16>
    %c0_27 = arith.constant 0 : index
    %c0_28 = arith.constant 0 : index
    %47 = vector.load %arg2[%c0_27, %c0_28] : memref<32x128xbf16, #tpu.memory_space<vmem>>, vector<32x128xbf16>
    %cst_29 = arith.constant dense<0.000000e+00> : vector<256x128xf32>
    %48 = tpu.matmul %46, %47, %cst_29 {dimension_numbers = #tpu.dot_dimension_numbers<[1], [0], [0], [1], [0, 0, 1, 1], [], []>} : vector<256x32xbf16>, vector<32x128xbf16>, vector<256x128xf32> -> vector<256x128xf32>
    %c0_30 = arith.constant 0 : index
    %c0_31 = arith.constant 0 : index
    %49 = vector.load %arg3[%c0_30, %c0_31] : memref<1x128xf32, #tpu.memory_space<vmem>>, vector<1x128xf32>
    %50 = vector.broadcast %49 : vector<1x128xf32> to vector<256x128xf32>
    %51 = arith.addf %48, %50 : vector<256x128xf32>
    %cst_32 = arith.constant 0.000000e+00 : f32
    %52 = vector.broadcast %cst_32 : f32 to vector<256x128xf32>
    %53 = arith.maximumf %51, %52 : vector<256x128xf32>
    %cst_33 = arith.constant dense<0.000000e+00> : vector<128xf32>
    %54 = vector.multi_reduction <add>, %53, %cst_33 [0] : vector<256x128xf32> to vector<128xf32>
    %55 = vector.shape_cast %54 : vector<128xf32> to vector<1x128xf32>
    %56 = arith.addf %42, %55 : vector<1x128xf32>
    %c4_i32 = arith.constant 4 : i32
    %cst_34 = arith.constant 9.765625E-4 : f32
    %57 = vector.broadcast %cst_34 : f32 to vector<1x128xf32>
    %58 = arith.mulf %56, %57 : vector<1x128xf32>
    %59 = arith.truncf %58 : vector<1x128xf32> to vector<1x128xbf16>
    %c0_35 = arith.constant 0 : index
    %c0_36 = arith.constant 0 : index
    %60 = vector.load %arg4[%c0_35, %c0_36] : memref<128x128xbf16, #tpu.memory_space<vmem>>, vector<128x128xbf16>
    %cst_37 = arith.constant dense<0.000000e+00> : vector<1x128xf32>
    %61 = tpu.matmul %59, %60, %cst_37 {dimension_numbers = #tpu.dot_dimension_numbers<[1], [0], [0], [1], [0, 0, 1, 1], [], []>} : vector<1x128xbf16>, vector<128x128xbf16>, vector<1x128xf32> -> vector<1x128xf32>
    %c0_38 = arith.constant 0 : index
    %c0_39 = arith.constant 0 : index
    %62 = vector.load %arg5[%c0_38, %c0_39] : memref<1x128xf32, #tpu.memory_space<vmem>>, vector<1x128xf32>
    %63 = arith.addf %61, %62 : vector<1x128xf32>
    %64 = vector.shape_cast %63 : vector<1x128xf32> to vector<1x1x128xf32>
    %c0_40 = arith.constant 0 : index
    %c0_41 = arith.constant 0 : index
    %c0_42 = arith.constant 0 : index
    %65 = vector.load %arg6[%c0_40, %c0_41, %c0_42] : memref<1x1x128xf32, #tpu.memory_space<vmem>>, vector<1x1x128xf32>
    tpu.vector_store %arg6[%c0_40, %c0_41, %c0_42], %64 {strides = array<i32>} : memref<1x1x128xf32, #tpu.memory_space<vmem>>, vector<1x1x128xf32>,
    return
  }
  func.func @transform_0(%arg0: i32) -> (i32, i32) {
    %c0_i32 = arith.constant 0 : i32
    %c0_i32_0 = arith.constant 0 : i32
    return %arg0, %c0_i32 : i32, i32
  }
  func.func @transform_1(%arg0: i32) -> (i32, i32) {
    %c0_i32 = arith.constant 0 : i32
    %c0_i32_0 = arith.constant 0 : i32
    %c0_i32_1 = arith.constant 0 : i32
    return %c0_i32, %c0_i32_0 : i32, i32
  }
  func.func @transform_2(%arg0: i32) -> (i32, i32) {
    %c0_i32 = arith.constant 0 : i32
    %c0_i32_0 = arith.constant 0 : i32
    %c0_i32_1 = arith.constant 0 : i32
    return %c0_i32, %c0_i32_0 : i32, i32
  }
  func.func @transform_3(%arg0: i32) -> (i32, i32) {
    %c0_i32 = arith.constant 0 : i32
    %c0_i32_0 = arith.constant 0 : i32
    %c0_i32_1 = arith.constant 0 : i32
    return %c0_i32, %c0_i32_0 : i32, i32
  }
  func.func @transform_4(%arg0: i32) -> (i32, i32) {
    %c0_i32 = arith.constant 0 : i32
    %c0_i32_0 = arith.constant 0 : i32
    %c0_i32_1 = arith.constant 0 : i32
    return %c0_i32, %c0_i32_0 : i32, i32
  }
  func.func @transform_5(%arg0: i32) -> (i32, i32, i32) {
    %c0_i32 = arith.constant 0 : i32
    %c0_i32_0 = arith.constant 0 : i32
    %c0_i32_1 = arith.constant 0 : i32
    return %arg0, %c0_i32, %c0_i32_0 : i32, i32, i32
  }
}

</mosaic_0001>

<llo_original>
// kernel: cnn2d_forward.1
$region0: #{cnn2d_forward.1}
  #allocation0 [shape = 'u32[]', space=smem, size = 0x4, offset = 0x4, fixed_abs, tag = 'smem constant byte address 0x4 - core index']
  #allocation1 [shape = 'u32[144,128]{1,0:T(1,128)}', space=vmem, size = 0x12000, scoped, tag = 'internal scratch']
  %s0 = inlined_call_operand.vmem [shape: bf16[4096,32], index: 0, kind: input, shape index: {}]
  %s1 = inlined_call_operand.vmem [shape: bf16[32,128], index: 1, kind: input, shape index: {}]
  %s2 = inlined_call_operand.vmem [shape: f32[1,128], index: 2, kind: input, shape index: {}]
  %s3 = inlined_call_operand.vmem [shape: bf16[128,128], index: 3, kind: input, shape index: {}]
  %s4 = inlined_call_operand.vmem [shape: f32[1,128], index: 4, kind: input, shape index: {}]
  %s5 = inlined_call_operand.hbm [shape: f32[4,1,128], index: 5, kind: output, shape index: {}]
  %s6 = sld [smem:[#allocation0]]
  $region53: #{cnn2d_forward.1} parent=0
    _
  %s8 = ssub.s32 1, %s6
  %s9 = scalar_select 0, %s8, %s6
  $region1: #{cnn2d_forward.1} parent=0
    #allocation2 [shape = 'u8[1024]{0}', space=vmem, size = 0x400, scoped, tag = 'output window, operand 0']
    #allocation3 [shape = 's32[2]{0}', space=sflag, size = 0x8, scoped, tag = 'scoped memory for cnn2d_forward.1']
    %10 = vsyncpa [#allocation3], 0
    %s11 = scalar_lea.sflag [#allocation3], 1
    %12 = vsyncpa %s11, 0
    loop: start=0, step=1, limit=6
    $region2: #{cnn2d_forward.1} parent=1 // loop_pre_header
      _
    $region3: #{cnn2d_forward.1} parent=1 // loop_header
      %s14 = sphi 0, %s18
      %p15 = scmp.ge.s32.totalorder %s14, 6
      %s24 = sphi 0, %s26
      %s27 = sphi 0, %s24
      %s28 = sphi 0, %s27
      %s44 = sphi 0, %s28
      %s48 = sphi 0, %s48
      %s50 = sphi 0, %s48
      %s51 = sphi 0, %s50
      %s65 = sphi 0, %s51
      %s69 = sphi 0, %s69
      %s71 = sphi 0, %s69
      %s72 = sphi 0, %s71
      %s86 = sphi 0, %s72
      %s90 = sphi 0, %s90
      %s92 = sphi 0, %s90
      %s93 = sphi 0, %s92
      %s107 = sphi 0, %s93
      %s111 = sphi 0, %s111
      %s113 = sphi 0, %s111
      %s114 = sphi 0, %s113
      %s128 = sphi 0, %s114
      %s134 = sphi 0, %s136
      %s137 = sphi 0, %s134
      %s138 = sphi 0, %s137
      %s154 = sphi 0, %s138
    $region4: #{cnn2d_forward.1} parent=1 // loop_header_branch
      %17 = sbr.rel (%p15) target = $region8
    $region5: #{cnn2d_forward.1} parent=1 // loop_body
      %s19 = ssub.s32 %s14, 1
      %s20 = ssub.s32 %s14, 2
      %s21 = sadd.s32 %s14, 1
      %s22 = ssub.s32 %s14, %s21
      %p23 = scmp.eq.s32.totalorder %s22, 0
      %s25 = sadd.s32 %s24, 1
      %s26 = scalar_select %p23, %s24, %s25
      %p29 = pneg %p23
      %p30 = scmp.eq.s32.totalorder %s14, 3
      %p31 = por %p29, %p30
      %p32 = scmp.ne.s32.totalorder %s24, %s27
      %p33 = scmp.eq.s32.totalorder %s14, 0
      %p34 = por %p32, %p33
      %p35 = scmp.ne.s32.totalorder %s24, %s27
      %p36 = scmp.eq.s32.totalorder %s19, 3
      %p37 = por %p35, %p36
      %p38 = scmp.ne.s32.totalorder %s27, %s28
      %p39 = scmp.eq.s32.totalorder %s19, 0
      %p40 = por %p38, %p39
      %p41 = scmp.ne.s32.totalorder %s27, %s28
      %p42 = scmp.eq.s32.totalorder %s20, 3
      %p43 = por %p41, %p42
      %p45 = scmp.ne.s32.totalorder %s28, %s44
      %p46 = scmp.eq.s32.totalorder %s20, 0
      %p47 = por %p45, %p46
      %s49 = sadd.s32 %s48, 1
      %p52 = scmp.eq.s32.totalorder %s14, 3
      %p53 = scmp.ne.s32.totalorder %s48, %s50
      %p54 = scmp.eq.s32.totalorder %s14, 0
      %p55 = por %p53, %p54
      %p56 = scmp.ne.s32.totalorder %s48, %s50
      %p57 = scmp.eq.s32.totalorder %s19, 3
      %p58 = por %p56, %p57
      %p59 = scmp.ne.s32.totalorder %s50, %s51
      %p60 = scmp.eq.s32.totalorder %s19, 0
      %p61 = por %p59, %p60
      %p62 = scmp.ne.s32.totalorder %s50, %s51
      %p63 = scmp.eq.s32.totalorder %s20, 3
      %p64 = por %p62, %p63
      %p66 = scmp.ne.s32.totalorder %s51, %s65
      %p67 = scmp.eq.s32.totalorder %s20, 0
      %p68 = por %p66, %p67
      %s70 = sadd.s32 %s69, 1
      %p73 = scmp.eq.s32.totalorder %s14, 3
      %p74 = scmp.ne.s32.totalorder %s69, %s71
      %p75 = scmp.eq.s32.totalorder %s14, 0
      %p76 = por %p74, %p75
      %p77 = scmp.ne.s32.totalorder %s69, %s71
      %p78 = scmp.eq.s32.totalorder %s19, 3
      %p79 = por %p77, %p78
      %p80 = scmp.ne.s32.totalorder %s71, %s72
      %p81 = scmp.eq.s32.totalorder %s19, 0
      %p82 = por %p80, %p81
      %p83 = scmp.ne.s32.totalorder %s71, %s72
      %p84 = scmp.eq.s32.totalorder %s20, 3
      %p85 = por %p83, %p84
      %p87 = scmp.ne.s32.totalorder %s72, %s86
      %p88 = scmp.eq.s32.totalorder %s20, 0
      %p89 = por %p87, %p88
      %s91 = sadd.s32 %s90, 1
      %p94 = scmp.eq.s32.totalorder %s14, 3
      %p95 = scmp.ne.s32.totalorder %s90, %s92
      %p96 = scmp.eq.s32.totalorder %s14, 0
      %p97 = por %p95, %p96
      %p98 = scmp.ne.s32.totalorder %s90, %s92
      %p99 = scmp.eq.s32.totalorder %s19, 3
      %p100 = por %p98, %p99
      %p101 = scmp.ne.s32.totalorder %s92, %s93
      %p102 = scmp.eq.s32.totalorder %s19, 0
      %p103 = por %p101, %p102
      %p104 = scmp.ne.s32.totalorder %s92, %s93
      %p105 = scmp.eq.s32.totalorder %s20, 3
      %p106 = por %p104, %p105
      %p108 = scmp.ne.s32.totalorder %s93, %s107
      %p109 = scmp.eq.s32.totalorder %s20, 0
      %p110 = por %p108, %p109
      %s112 = sadd.s32 %s111, 1
      %p115 = scmp.eq.s32.totalorder %s14, 3
      %p116 = scmp.ne.s32.totalorder %s111, %s113
      %p117 = scmp.eq.s32.totalorder %s14, 0
      %p118 = por %p116, %p117
      %p119 = scmp.ne.s32.totalorder %s111, %s113
      %p120 = scmp.eq.s32.totalorder %s19, 3
      %p121 = por %p119, %p120
      %p122 = scmp.ne.s32.totalorder %s113, %s114
      %p123 = scmp.eq.s32.totalorder %s19, 0
      %p124 = por %p122, %p123
      %p125 = scmp.ne.s32.totalorder %s113, %s114
      %p126 = scmp.eq.s32.totalorder %s20, 3
      %p127 = por %p125, %p126
      %p129 = scmp.ne.s32.totalorder %s114, %s128
      %p130 = scmp.eq.s32.totalorder %s20, 0
      %p131 = por %p129, %p130
      %s132 = ssub.s32 %s14, %s21
      %p133 = scmp.eq.s32.totalorder %s132, 0
      %s135 = sadd.s32 %s134, 1
      %s136 = scalar_select %p133, %s134, %s135
      %p139 = pneg %p133
      %p140 = scmp.eq.s32.totalorder %s14, 3
      %p141 = por %p139, %p140
      %p142 = scmp.ne.s32.totalorder %s134, %s137
      %p143 = scmp.eq.s32.totalorder %s14, 0
      %p144 = por %p142, %p143
      %p145 = scmp.ne.s32.totalorder %s134, %s137
      %p146 = scmp.eq.s32.totalorder %s19, 3
      %p147 = por %p145, %p146
      %p148 = scmp.ne.s32.totalorder %s137, %s138
      %p149 = scmp.eq.s32.totalorder %s19, 0
      %p150 = por %p148, %p149
      %p151 = scmp.ne.s32.totalorder %s137, %s138
      %p152 = scmp.eq.s32.totalorder %s20, 3
      %p153 = por %p151, %p152
      %p155 = scmp.ne.s32.totalorder %s138, %s154
      %p156 = scmp.eq.s32.totalorder %s20, 0
      %p157 = por %p155, %p156
      %p158 = scmp.le.s32.totalorder 1, %s14
      %p159 = scmp.lt.s32.totalorder %s14, 5
      %p160 = pnand %p158, %p159
      %p161 = pneg %p160
      // Predicated region
      $region9: #{cnn2d_forward.1} parent=5 // pred_check
        _
      $region10: #{cnn2d_forward.1} parent=5 // pred_check_branch
        %163 = sbr.rel (%p160) target = $region12
      $region11: #{cnn2d_forward.1} parent=5 // pred_region
        %s164 = ssub.s32 %s14, 1
        // Predicated region
        $region13: #{cnn2d_forward.1} parent=11 // pred_check
          %p165 = pneg %p61
        $region14: #{cnn2d_forward.1} parent=11 // pred_check_branch
          %167 = sbr.rel (%p165) target = $region16
        $region15: #{cnn2d_forward.1} parent=11 // pred_region
          _
        $region16: #{cnn2d_forward.1} parent=11 // pred_fallthru
          _
        // Predicated region
        $region17: #{cnn2d_forward.1} parent=11 // pred_check
          %p168 = pneg %p82
        $region18: #{cnn2d_forward.1} parent=11 // pred_check_branch
          %170 = sbr.rel (%p168) target = $region20
        $region19: #{cnn2d_forward.1} parent=11 // pred_region
          _
        $region20: #{cnn2d_forward.1} parent=11 // pred_fallthru
          _
        // Predicated region
        $region21: #{cnn2d_forward.1} parent=11 // pred_check
          %p171 = pneg %p103
        $region22: #{cnn2d_forward.1} parent=11 // pred_check_branch
          %173 = sbr.rel (%p171) target = $region24
        $region23: #{cnn2d_forward.1} parent=11 // pred_region
          _
        $region24: #{cnn2d_forward.1} parent=11 // pred_fallthru
          _
        // Predicated region
        $region25: #{cnn2d_forward.1} parent=11 // pred_check
          %p174 = pneg %p124
        $region26: #{cnn2d_forward.1} parent=11 // pred_check_branch
          %176 = sbr.rel (%p174) target = $region28
        $region27: #{cnn2d_forward.1} parent=11 // pred_region
          _
        $region28: #{cnn2d_forward.1} parent=11 // pred_fallthru
          _
      $region12: #{cnn2d_forward.1} parent=5 // pred_fallthru
        _
      %p177 = scmp.lt.s32.totalorder %s14, 4
      // Predicated region
      $region29: #{cnn2d_forward.1} parent=5 // pred_check
        %p178 = pneg %p177
      $region30: #{cnn2d_forward.1} parent=5 // pred_check_branch
        %180 = sbr.rel (%p178) target = $region32
      $region31: #{cnn2d_forward.1} parent=5 // pred_region
        // Predicated region
        $region33: #{cnn2d_forward.1} parent=31 // pred_check
          %p181 = pneg %p34
        $region34: #{cnn2d_forward.1} parent=31 // pred_check_branch
          %183 = sbr.rel (%p181) target = $region36
        $region35: #{cnn2d_forward.1} parent=31 // pred_region
          %s184 = smul.u32 128, %s14
          %p185 = scmp.lt.s32.totalorder %s184, 511
          %s186 = scalar_select %p185, %s184, 511
          %s187 = smul.addr %s186, 4
          %s188 = scalar_lea.vmem %s0, %s187
          %s189 = smul.u32 128, %s14
        $region36: #{cnn2d_forward.1} parent=31 // pred_fallthru
          _
      $region32: #{cnn2d_forward.1} parent=5 // pred_fallthru
        _
      %p190 = scmp.le.s32.totalorder 1, %s14
      %p191 = scmp.lt.s32.totalorder %s14, 5
      %p192 = pnand %p190, %p191
      %p193 = pneg %p192
      // Predicated region
      $region37: #{cnn2d_forward.1} parent=5 // pred_check
        _
      $region38: #{cnn2d_forward.1} parent=5 // pred_check_branch
        %195 = sbr.rel (%p192) target = $region40
      $region39: #{cnn2d_forward.1} parent=5 // pred_region
        %s196 = ssub.s32 %s14, 1
        %s197 = smul.u32 128, %s19
        %p198 = scmp.lt.s32.totalorder %s197, 511
        %s199 = scalar_select %p198, %s197, 511
        %s200 = smul.addr %s199, 4
        %s201 = scalar_lea.vmem %s0, %s200
        %p202 = pneg %p40
        %p203 = pneg %p37
        %p204 = pneg %p61
        %p205 = pneg %p58
        %p206 = pneg %p82
        %p207 = pneg %p79
        %p208 = pneg %p103
        %p209 = pneg %p100
        %p210 = pneg %p124
        %p211 = pneg %p121
        %p212 = pneg %p150
        %p213 = pneg %p147
        %s214 = sand.u32 %s137, 1
        %s215 = scalar_lea.sflag [#allocation3], %s214
        %s216 = sand.u32 %s137, 1
        %s217 = scalar_lea.vmem [#allocation2], %s216
        %s218 = smul.u32 128, %s19
        %p219 = scmp.lt.s32.totalorder %s218, 511
        %s220 = scalar_select %p219, %s218, 511
        %s221 = smul.addr %s220, 4
        %s222 = scalar_lea.vmem %s0, %s221
        %s223 = smul.u32 128, %s19
        %v225 = vld [vmem:[%s222] sm:$0xf]
        %v226 = vld [vmem:[%s222 + $0x4] sm:$0xf]
        %v227 = vld [vmem:[%s222 + $0x8] sm:$0xf]
        %v228 = vld [vmem:[%s222 + $0xc] sm:$0xf]
        %v229 = vld [vmem:[%s222 + $0x10] sm:$0xf]
        %v230 = vld [vmem:[%s222 + $0x14] sm:$0xf]
        %v231 = vld [vmem:[%s222 + $0x18] sm:$0xf]
        %v232 = vld [vmem:[%s222 + $0x1c] sm:$0xf]
        %v233 = vld [vmem:[%s222 + $0x20] sm:$0xf]
        %v234 = vld [vmem:[%s222 + $0x24] sm:$0xf]
        %v235 = vld [vmem:[%s222 + $0x28] sm:$0xf]
        %v236 = vld [vmem:[%s222 + $0x2c] sm:$0xf]
        %v237 = vld [vmem:[%s222 + $0x30] sm:$0xf]
        %v238 = vld [vmem:[%s222 + $0x34] sm:$0xf]
        %v239 = vld [vmem:[%s222 + $0x38] sm:$0xf]
        %v240 = vld [vmem:[%s222 + $0x3c] sm:$0xf]
        %v241 = vld [vmem:[%s222 + $0x40] sm:$0xf]
        %v242 = vld [vmem:[%s222 + $0x44] sm:$0xf]
        %v243 = vld [vmem:[%s222 + $0x48] sm:$0xf]
        %v244 = vld [vmem:[%s222 + $0x4c] sm:$0xf]
        %v245 = vld [vmem:[%s222 + $0x50] sm:$0xf]
        %v246 = vld [vmem:[%s222 + $0x54] sm:$0xf]
        %v247 = vld [vmem:[%s222 + $0x58] sm:$0xf]
        %v248 = vld [vmem:[%s222 + $0x5c] sm:$0xf]
        %v249 = vld [vmem:[%s222 + $0x60] sm:$0xf]
        %v250 = vld [vmem:[%s222 + $0x64] sm:$0xf]
        %v251 = vld [vmem:[%s222 + $0x68] sm:$0xf]
        %v252 = vld [vmem:[%s222 + $0x6c] sm:$0xf]
        %v253 = vld [vmem:[%s222 + $0x70] sm:$0xf]
        %v254 = vld [vmem:[%s222 + $0x74] sm:$0xf]
        %v255 = vld [vmem:[%s222 + $0x78] sm:$0xf]
        %v256 = vld [vmem:[%s222 + $0x7c] sm:$0xf]
        %v257 = vld [vmem:[%s1] sm:$0xf]
        %v258 = vld [vmem:[%s1 + $0x4] sm:$0xf]
        %v259 = vld [vmem:[%s1 + $0x8] sm:$0xf]
        %v260 = vld [vmem:[%s1 + $0xc] sm:$0xf]
        %v261 = vld [vmem:[%s2] sm:$0x1]
        %v263 = vlaneseq
        %v264 = vshrl.u32 %v263, 7
        %v265 = vsub.s32 0, %v264
        %v266 = vrot.slane %v261, %v265
        %v300 = vunpack.c.l.b16 %v225
        %v301 = vunpack.c.l.b16 %v226
        %v302 = vunpack.c.l.b16 %v227
        %v303 = vunpack.c.l.b16 %v228
        %v304 = vunpack.c.l.b16 %v229
        %v305 = vunpack.c.l.b16 %v230
        %v306 = vunpack.c.l.b16 %v231
        %v307 = vunpack.c.l.b16 %v232
        %v308 = vunpack.c.l.b16 %v233
        %v309 = vunpack.c.l.b16 %v234
        %v310 = vunpack.c.l.b16 %v235
        %v311 = vunpack.c.l.b16 %v236
        %v312 = vunpack.c.l.b16 %v237
        %v313 = vunpack.c.l.b16 %v238
        %v314 = vunpack.c.l.b16 %v239
        %v315 = vunpack.c.l.b16 %v240
        %v316 = vunpack.c.l.b16 %v241
        %v317 = vunpack.c.l.b16 %v242
        %v318 = vunpack.c.l.b16 %v243
        %v319 = vunpack.c.l.b16 %v244
        %v320 = vunpack.c.l.b16 %v245
        %v321 = vunpack.c.l.b16 %v246
        %v322 = vunpack.c.l.b16 %v247
        %v323 = vunpack.c.l.b16 %v248
        %v324 = vunpack.c.l.b16 %v249
        %v325 = vunpack.c.l.b16 %v250
        %v326 = vunpack.c.l.b16 %v251
        %v327 = vunpack.c.l.b16 %v252
        %v328 = vunpack.c.l.b16 %v253
        %v329 = vunpack.c.l.b16 %v254
        %v330 = vunpack.c.l.b16 %v255
        %v331 = vunpack.c.l.b16 %v256
        %v332 = vpack.c.b16 %v301, %v300
        %v333 = vpack.c.b16 %v303, %v302
        %v334 = vpack.c.b16 %v305, %v304
        %v335 = vpack.c.b16 %v307, %v306
        %v336 = vpack.c.b16 %v309, %v308
        %v337 = vpack.c.b16 %v311, %v310
        %v338 = vpack.c.b16 %v313, %v312
        %v339 = vpack.c.b16 %v315, %v314
        %v340 = vpack.c.b16 %v317, %v316
        %v341 = vpack.c.b16 %v319, %v318
        %v342 = vpack.c.b16 %v321, %v320
        %v343 = vpack.c.b16 %v323, %v322
        %v344 = vpack.c.b16 %v325, %v324
        %v345 = vpack.c.b16 %v327, %v326
        %v346 = vpack.c.b16 %v329, %v328
        %v347 = vpack.c.b16 %v331, %v330
        %v352 = vunpack.c.l.b16 %v257
        %v353 = vunpack.c.l.b16 %v258
        %v354 = vunpack.c.l.b16 %v259
        %v355 = vunpack.c.l.b16 %v260
        %v356 = vpack.c.b16 %v353, %v352
        %v357 = vpack.c.b16 %v355, %v354
        %vm360 = vcmask 261120
        %v362 = vsel %vm360, %v332, 0
        %v365 = vsel %vm360, %v333, 0
        %v368 = vsel %vm360, %v334, 0
        %v371 = vsel %vm360, %v335, 0
        %v374 = vsel %vm360, %v336, 0
        %v377 = vsel %vm360, %v337, 0
        %v380 = vsel %vm360, %v338, 0
        %v383 = vsel %vm360, %v339, 0
        %v386 = vsel %vm360, %v340, 0
        %v389 = vsel %vm360, %v341, 0
        %v392 = vsel %vm360, %v342, 0
        %v395 = vsel %vm360, %v343, 0
        %v398 = vsel %vm360, %v344, 0
        %v401 = vsel %vm360, %v345, 0
        %v404 = vsel %vm360, %v346, 0
        %v407 = vsel %vm360, %v347, 0
        %409 = vmatprep.subr.bf16.mxu0 0
        %410 = vmatpush1.bf16.msra.mxu0 %v356
        %411 = vmatprep.subr.bf16.mxu0 0
        %412 = vmatpush1.bf16.msra.mxu0 %v357
        %413 = vmatprep.subr.bf16.mxu0 0
        %414 = vmatpush1.bf16.msra.mxu0 0
        %415 = vmatprep.subr.bf16.mxu0 0
        %416 = vmatpush1.bf16.msra.mxu0 0
        %417 = vmatprep.subr.bf16.mxu0 0
        %418 = vmatpush1.bf16.msra.mxu0 0
        %419 = vmatprep.subr.bf16.mxu0 0
        %420 = vmatpush1.bf16.msra.mxu0 0
        %421 = vmatprep.subr.bf16.mxu0 0
        %422 = vmatpush1.bf16.msra.mxu0 0
        %423 = vmatprep.subr.bf16.mxu0 0
        %424 = vmatpush1.bf16.msra.mxu0 0
        %425 = vmatprep.subr.bf16.mxu0 0
        %426 = vmatpush1.bf16.msra.mxu0 0
        %427 = vmatprep.subr.bf16.mxu0 0
        %428 = vmatpush1.bf16.msra.mxu0 0
        %429 = vmatprep.subr.bf16.mxu0 0
        %430 = vmatpush1.bf16.msra.mxu0 0
        %431 = vmatprep.subr.bf16.mxu0 0
        %432 = vmatpush1.bf16.msra.mxu0 0
        %433 = vmatprep.subr.bf16.mxu0 0
        %434 = vmatpush1.bf16.msra.mxu0 0
        %435 = vmatprep.subr.bf16.mxu0 0
        %436 = vmatpush1.bf16.msra.mxu0 0
        %437 = vmatprep.subr.bf16.mxu0 0
        %438 = vmatpush1.bf16.msra.mxu0 0
        %439 = vmatprep.subr.bf16.mxu0 0
        %440 = vmatpush1.bf16.msra.mxu0 0
        %441 = vmatprep.mubr.bf16.mxu0 0
        %442 = vmatmul.mubr.bf16.gmra.mrb[0].mxu0 %v362
        %v443 = vpop.f32.mrb[0].mxu0
        %v444 = vadd.f32 %v266, %v443
        %v445 = vpop.f32.mrb[0].mxu0
        %v446 = vpop.f32.mrb[0].mxu0
        %v447 = vadd.f32 %v266, %v446
        %v448 = vpop.f32.mrb[0].mxu0
        %449 = vmatprep.mubr.bf16.mxu0 0
        %450 = vmatmul.mubr.bf16.gmra.mrb[0].mxu0 %v365
        %v451 = vpop.f32.mrb[0].mxu0
        %v452 = vadd.f32 %v266, %v451
        %v453 = vpop.f32.mrb[0].mxu0
        %v454 = vpop.f32.mrb[0].mxu0
        %v455 = vadd.f32 %v266, %v454
        %v456 = vpop.f32.mrb[0].mxu0
        %457 = vmatprep.mubr.bf16.mxu0 0
        %458 = vmatmul.mubr.bf16.gmra.mrb[0].mxu0 %v368
        %v459 = vpop.f32.mrb[0].mxu0
        %v460 = vadd.f32 %v266, %v459
        %v461 = vpop.f32.mrb[0].mxu0
        %v462 = vpop.f32.mrb[0].mxu0
        %v463 = vadd.f32 %v266, %v462
        %v464 = vpop.f32.mrb[0].mxu0
        %465 = vmatprep.mubr.bf16.mxu0 0
        %466 = vmatmul.mubr.bf16.gmra.mrb[0].mxu0 %v371
        %v467 = vpop.f32.mrb[0].mxu0
        %v468 = vadd.f32 %v266, %v467
        %v469 = vpop.f32.mrb[0].mxu0
        %v470 = vpop.f32.mrb[0].mxu0
        %v471 = vadd.f32 %v266, %v470
        %v472 = vpop.f32.mrb[0].mxu0
        %473 = vmatprep.mubr.bf16.mxu0 0
        %474 = vmatmul.mubr.bf16.gmra.mrb[0].mxu0 %v374
        %v475 = vpop.f32.mrb[0].mxu0
        %v476 = vadd.f32 %v266, %v475
        %v477 = vpop.f32.mrb[0].mxu0
        %v478 = vpop.f32.mrb[0].mxu0
        %v479 = vadd.f32 %v266, %v478
        %v480 = vpop.f32.mrb[0].mxu0
        %481 = vmatprep.mubr.bf16.mxu0 0
        %482 = vmatmul.mubr.bf16.gmra.mrb[0].mxu0 %v377
        %v483 = vpop.f32.mrb[0].mxu0
        %v484 = vadd.f32 %v266, %v483
        %v485 = vpop.f32.mrb[0].mxu0
        %v486 = vpop.f32.mrb[0].mxu0
        %v487 = vadd.f32 %v266, %v486
        %v488 = vpop.f32.mrb[0].mxu0
        %489 = vmatprep.mubr.bf16.mxu0 0
        %490 = vmatmul.mubr.bf16.gmra.mrb[0].mxu0 %v380
        %v491 = vpop.f32.mrb[0].mxu0
        %v492 = vadd.f32 %v266, %v491
        %v493 = vpop.f32.mrb[0].mxu0
        %v494 = vpop.f32.mrb[0].mxu0
        %v495 = vadd.f32 %v266, %v494
        %v496 = vpop.f32.mrb[0].mxu0
        %497 = vmatprep.mubr.bf16.mxu0 0
        %498 = vmatmul.mubr.bf16.gmra.mrb[0].mxu0 %v383
        %v499 = vpop.f32.mrb[0].mxu0
        %v500 = vadd.f32 %v266, %v499
        %v501 = vpop.f32.mrb[0].mxu0
        %v502 = vpop.f32.mrb[0].mxu0
        %v503 = vadd.f32 %v266, %v502
        %v504 = vpop.f32.mrb[0].mxu0
        %505 = vmatprep.mubr.bf16.mxu0 0
        %506 = vmatmul.mubr.bf16.gmra.mrb[0].mxu0 %v386
        %v507 = vpop.f32.mrb[0].mxu0
        %v508 = vadd.f32 %v266, %v507
        %v509 = vpop.f32.mrb[0].mxu0
        %v510 = vpop.f32.mrb[0].mxu0
        %v511 = vadd.f32 %v266, %v510
        %v512 = vpop.f32.mrb[0].mxu0
        %513 = vmatprep.mubr.bf16.mxu0 0
        %514 = vmatmul.mubr.bf16.gmra.mrb[0].mxu0 %v389
        %v515 = vpop.f32.mrb[0].mxu0
        %v516 = vadd.f32 %v266, %v515
        %v517 = vpop.f32.mrb[0].mxu0
        %v518 = vpop.f32.mrb[0].mxu0
        %v519 = vadd.f32 %v266, %v518
        %v520 = vpop.f32.mrb[0].mxu0
        %521 = vmatprep.mubr.bf16.mxu0 0
        %522 = vmatmul.mubr.bf16.gmra.mrb[0].mxu0 %v392
        %v523 = vpop.f32.mrb[0].mxu0
        %v524 = vadd.f32 %v266, %v523
        %v525 = vpop.f32.mrb[0].mxu0
        %v526 = vpop.f32.mrb[0].mxu0
        %v527 = vadd.f32 %v266, %v526
        %v528 = vpop.f32.mrb[0].mxu0
        %529 = vmatprep.mubr.bf16.mxu0 0
        %530 = vmatmul.mubr.bf16.gmra.mrb[0].mxu0 %v395
        %v531 = vpop.f32.mrb[0].mxu0
        %v532 = vadd.f32 %v266, %v531
        %v533 = vpop.f32.mrb[0].mxu0
        %v534 = vpop.f32.mrb[0].mxu0
        %v535 = vadd.f32 %v266, %v534
        %v536 = vpop.f32.mrb[0].mxu0
        %537 = vmatprep.mubr.bf16.mxu0 0
        %538 = vmatmul.mubr.bf16.gmra.mrb[0].mxu0 %v398
        %v539 = vpop.f32.mrb[0].mxu0
        %v540 = vadd.f32 %v266, %v539
        %v541 = vpop.f32.mrb[0].mxu0
        %v542 = vpop.f32.mrb[0].mxu0
        %v543 = vadd.f32 %v266, %v542
        %v544 = vpop.f32.mrb[0].mxu0
        %545 = vmatprep.mubr.bf16.mxu0 0
        %546 = vmatmul.mubr.bf16.gmra.mrb[0].mxu0 %v401
        %v547 = vpop.f32.mrb[0].mxu0
        %v548 = vadd.f32 %v266, %v547
        %v549 = vpop.f32.mrb[0].mxu0
        %v550 = vpop.f32.mrb[0].mxu0
        %v551 = vadd.f32 %v266, %v550
        %v552 = vpop.f32.mrb[0].mxu0
        %553 = vmatprep.mubr.bf16.mxu0 0
        %554 = vmatmul.mubr.bf16.gmra.mrb[0].mxu0 %v404
        %v555 = vpop.f32.mrb[0].mxu0
        %v556 = vadd.f32 %v266, %v555
        %v557 = vpop.f32.mrb[0].mxu0
        %v558 = vpop.f32.mrb[0].mxu0
        %v559 = vadd.f32 %v266, %v558
        %v560 = vpop.f32.mrb[0].mxu0
        %561 = vmatprep.mubr.bf16.mxu0 0
        %562 = vmatmul.mubr.bf16.gmra.mrb[0].mxu0 %v407
        %v563 = vpop.f32.mrb[0].mxu0
        %v564 = vadd.f32 %v266, %v563
        %v565 = vpop.f32.mrb[0].mxu0
        %v566 = vpop.f32.mrb[0].mxu0
        %v567 = vadd.f32 %v266, %v566
        %v568 = vpop.f32.mrb[0].mxu0
        %569 = vdwg.mxu0
        %v570 = vmax.f32 %v444, 0.0
        %v571 = vmax.f32 %v447, 0.0
        %v572 = vmax.f32 %v452, 0.0
        %v573 = vmax.f32 %v455, 0.0
        %v574 = vmax.f32 %v460, 0.0
        %v575 = vmax.f32 %v463, 0.0
        %v576 = vmax.f32 %v468, 0.0
        %v577 = vmax.f32 %v471, 0.0
        %v578 = vmax.f32 %v476, 0.0
        %v579 = vmax.f32 %v479, 0.0
        %v580 = vmax.f32 %v484, 0.0
        %v581 = vmax.f32 %v487, 0.0
        %v582 = vmax.f32 %v492, 0.0
        %v583 = vmax.f32 %v495, 0.0
        %v584 = vmax.f32 %v500, 0.0
        %v585 = vmax.f32 %v503, 0.0
        %v586 = vmax.f32 %v508, 0.0
        %v587 = vmax.f32 %v511, 0.0
        %v588 = vmax.f32 %v516, 0.0
        %v589 = vmax.f32 %v519, 0.0
        %v590 = vmax.f32 %v524, 0.0
        %v591 = vmax.f32 %v527, 0.0
        %v592 = vmax.f32 %v532, 0.0
        %v593 = vmax.f32 %v535, 0.0
        %v594 = vmax.f32 %v540, 0.0
        %v595 = vmax.f32 %v543, 0.0
        %v596 = vmax.f32 %v548, 0.0
        %v597 = vmax.f32 %v551, 0.0
        %v598 = vmax.f32 %v556, 0.0
        %v599 = vmax.f32 %v559, 0.0
        %v600 = vmax.f32 %v564, 0.0
        %v601 = vmax.f32 %v567, 0.0
        %v602 = vadd.f32 %v570, %v571
        %v603 = vadd.f32 %v602, %v572
        %v604 = vadd.f32 %v603, %v573
        %v605 = vadd.f32 %v604, %v574
        %v606 = vadd.f32 %v605, %v575
        %v607 = vadd.f32 %v606, %v576
        %v608 = vadd.f32 %v607, %v577
        %v609 = vadd.f32 %v608, %v578
        %v610 = vadd.f32 %v609, %v579
        %v611 = vadd.f32 %v610, %v580
        %v612 = vadd.f32 %v611, %v581
        %v613 = vadd.f32 %v612, %v582
        %v614 = vadd.f32 %v613, %v583
        %v615 = vadd.f32 %v614, %v584
        %v616 = vadd.f32 %v615, %v585
        %v617 = vadd.f32 %v616, %v586
        %v618 = vadd.f32 %v617, %v587
        %v619 = vadd.f32 %v618, %v588
        %v620 = vadd.f32 %v619, %v589
        %v621 = vadd.f32 %v620, %v590
        %v622 = vadd.f32 %v621, %v591
        %v623 = vadd.f32 %v622, %v592
        %v624 = vadd.f32 %v623, %v593
        %v625 = vadd.f32 %v624, %v594
        %v626 = vadd.f32 %v625, %v595
        %v627 = vadd.f32 %v626, %v596
        %v628 = vadd.f32 %v627, %v597
        %v629 = vadd.f32 %v628, %v598
        %v630 = vadd.f32 %v629, %v599
        %v631 = vadd.f32 %v630, %v600
        %v632 = vadd.f32 %v631, %v601
        %v633 = vrot.slane %v632, 4
        %v634 = vadd.f32 %v632, %v633
        %v635 = vrot.slane %v634, 2
        %v636 = vadd.f32 %v634, %v635
        %v637 = vrot.slane %v636, 1
        %v638 = vadd.f32 %v636, %v637
        %v639 = vadd.f32 %v638, 0.0
        %s640 = scalar_lea.vmem %s222, 128
        %v641 = vld [vmem:[%s640] sm:$0xf]
        %v642 = vld [vmem:[%s640 + $0x4] sm:$0xf]
        %v643 = vld [vmem:[%s640 + $0x8] sm:$0xf]
        %v644 = vld [vmem:[%s640 + $0xc] sm:$0xf]
        %v645 = vld [vmem:[%s640 + $0x10] sm:$0xf]
        %v646 = vld [vmem:[%s640 + $0x14] sm:$0xf]
        %v647 = vld [vmem:[%s640 + $0x18] sm:$0xf]
        %v648 = vld [vmem:[%s640 + $0x1c] sm:$0xf]
        %v649 = vld [vmem:[%s640 + $0x20] sm:$0xf]
        %v650 = vld [vmem:[%s640 + $0x24] sm:$0xf]
        %v651 = vld [vmem:[%s640 + $0x28] sm:$0xf]
        %v652 = vld [vmem:[%s640 + $0x2c] sm:$0xf]
        %v653 = vld [vmem:[%s640 + $0x30] sm:$0xf]
        %v654 = vld [vmem:[%s640 + $0x34] sm:$0xf]
        %v655 = vld [vmem:[%s640 + $0x38] sm:$0xf]
        %v656 = vld [vmem:[%s640 + $0x3c] sm:$0xf]
        %v657 = vld [vmem:[%s640 + $0x40] sm:$0xf]
        %v658 = vld [vmem:[%s640 + $0x44] sm:$0xf]
        %v659 = vld [vmem:[%s640 + $0x48] sm:$0xf]
        %v660 = vld [vmem:[%s640 + $0x4c] sm:$0xf]
        %v661 = vld [vmem:[%s640 + $0x50] sm:$0xf]
        %v662 = vld [vmem:[%s640 + $0x54] sm:$0xf]
        %v663 = vld [vmem:[%s640 + $0x58] sm:$0xf]
        %v664 = vld [vmem:[%s640 + $0x5c] sm:$0xf]
        %v665 = vld [vmem:[%s640 + $0x60] sm:$0xf]
        %v666 = vld [vmem:[%s640 + $0x64] sm:$0xf]
        %v667 = vld [vmem:[%s640 + $0x68] sm:$0xf]
        %v668 = vld [vmem:[%s640 + $0x6c] sm:$0xf]
        %v669 = vld [vmem:[%s640 + $0x70] sm:$0xf]
        %v670 = vld [vmem:[%s640 + $0x74] sm:$0xf]
        %v671 = vld [vmem:[%s640 + $0x78] sm:$0xf]
        %v672 = vld [vmem:[%s640 + $0x7c] sm:$0xf]
        %v705 = vunpack.c.l.b16 %v641
        %v706 = vunpack.c.l.b16 %v642
        %v707 = vunpack.c.l.b16 %v643
        %v708 = vunpack.c.l.b16 %v644
        %v709 = vunpack.c.l.b16 %v645
        %v710 = vunpack.c.l.b16 %v646
        %v711 = vunpack.c.l.b16 %v647
        %v712 = vunpack.c.l.b16 %v648
        %v713 = vunpack.c.l.b16 %v649
        %v714 = vunpack.c.l.b16 %v650
        %v715 = vunpack.c.l.b16 %v651
        %v716 = vunpack.c.l.b16 %v652
        %v717 = vunpack.c.l.b16 %v653
        %v718 = vunpack.c.l.b16 %v654
        %v719 = vunpack.c.l.b16 %v655
        %v720 = vunpack.c.l.b16 %v656
        %v721 = vunpack.c.l.b16 %v657
        %v722 = vunpack.c.l.b16 %v658
        %v723 = vunpack.c.l.b16 %v659
        %v724 = vunpack.c.l.b16 %v660
        %v725 = vunpack.c.l.b16 %v661
        %v726 = vunpack.c.l.b16 %v662
        %v727 = vunpack.c.l.b16 %v663
        %v728 = vunpack.c.l.b16 %v664
        %v729 = vunpack.c.l.b16 %v665
        %v730 = vunpack.c.l.b16 %v666
        %v731 = vunpack.c.l.b16 %v667
        %v732 = vunpack.c.l.b16 %v668
        %v733 = vunpack.c.l.b16 %v669
        %v734 = vunpack.c.l.b16 %v670
        %v735 = vunpack.c.l.b16 %v671
        %v736 = vunpack.c.l.b16 %v672
        %v737 = vpack.c.b16 %v706, %v705
        %v738 = vpack.c.b16 %v708, %v707
        %v739 = vpack.c.b16 %v710, %v709
        %v740 = vpack.c.b16 %v712, %v711
        %v741 = vpack.c.b16 %v714, %v713
        %v742 = vpack.c.b16 %v716, %v715
        %v743 = vpack.c.b16 %v718, %v717
        %v744 = vpack.c.b16 %v720, %v719
        %v745 = vpack.c.b16 %v722, %v721
        %v746 = vpack.c.b16 %v724, %v723
        %v747 = vpack.c.b16 %v726, %v725
        %v748 = vpack.c.b16 %v728, %v727
        %v749 = vpack.c.b16 %v730, %v729
        %v750 = vpack.c.b16 %v732, %v731
        %v751 = vpack.c.b16 %v734, %v733
        %v752 = vpack.c.b16 %v736, %v735
        %v754 = vsel %vm360, %v737, 0
        %v757 = vsel %vm360, %v738, 0
        %v760 = vsel %vm360, %v739, 0
        %v763 = vsel %vm360, %v740, 0
        %v766 = vsel %vm360, %v741, 0
        %v769 = vsel %vm360, %v742, 0
        %v772 = vsel %vm360, %v743, 0
        %v775 = vsel %vm360, %v744, 0
        %v778 = vsel %vm360, %v745, 0
        %v781 = vsel %vm360, %v746, 0
        %v784 = vsel %vm360, %v747, 0
        %v787 = vsel %vm360, %v748, 0
        %v790 = vsel %vm360, %v749, 0
        %v793 = vsel %vm360, %v750, 0
        %v796 = vsel %vm360, %v751, 0
        %v799 = vsel %vm360, %v752, 0
        %801 = vmatprep.subr.bf16.mxu0 0
        %802 = vmatpush1.bf16.msra.mxu0 %v356
        %803 = vmatprep.subr.bf16.mxu0 0
        %804 = vmatpush1.bf16.msra.mxu0 %v357
        %805 = vmatprep.subr.bf16.mxu0 0
        %806 = vmatpush1.bf16.msra.mxu0 0
        %807 = vmatprep.subr.bf16.mxu0 0
        %808 = vmatpush1.bf16.msra.mxu0 0
        %809 = vmatprep.subr.bf16.mxu0 0
        %810 = vmatpush1.bf16.msra.mxu0 0
        %811 = vmatprep.subr.bf16.mxu0 0
        %812 = vmatpush1.bf16.msra.mxu0 0
        %813 = vmatprep.subr.bf16.mxu0 0
        %814 = vmatpush1.bf16.msra.mxu0 0
        %815 = vmatprep.subr.bf16.mxu0 0
        %816 = vmatpush1.bf16.msra.mxu0 0
        %817 = vmatprep.subr.bf16.mxu0 0
        %818 = vmatpush1.bf16.msra.mxu0 0
        %819 = vmatprep.subr.bf16.mxu0 0
        %820 = vmatpush1.bf16.msra.mxu0 0
        %821 = vmatprep.subr.bf16.mxu0 0
        %822 = vmatpush1.bf16.msra.mxu0 0
        %823 = vmatprep.subr.bf16.mxu0 0
        %824 = vmatpush1.bf16.msra.mxu0 0
        %825 = vmatprep.subr.bf16.mxu0 0
        %826 = vmatpush1.bf16.msra.mxu0 0
        %827 = vmatprep.subr.bf16.mxu0 0
        %828 = vmatpush1.bf16.msra.mxu0 0
        %829 = vmatprep.subr.bf16.mxu0 0
        %830 = vmatpush1.bf16.msra.mxu0 0
        %831 = vmatprep.subr.bf16.mxu0 0
        %832 = vmatpush1.bf16.msra.mxu0 0
        %833 = vmatprep.mubr.bf16.mxu0 0
        %834 = vmatmul.mubr.bf16.gmra.mrb[0].mxu0 %v754
        %v835 = vpop.f32.mrb[0].mxu0
        %v836 = vadd.f32 %v266, %v835
        %v837 = vpop.f32.mrb[0].mxu0
        %v838 = vpop.f32.mrb[0].mxu0
        %v839 = vadd.f32 %v266, %v838
        %v840 = vpop.f32.mrb[0].mxu0
        %841 = vmatprep.mubr.bf16.mxu0 0
        %842 = vmatmul.mubr.bf16.gmra.mrb[0].mxu0 %v757
        %v843 = vpop.f32.mrb[0].mxu0
        %v844 = vadd.f32 %v266, %v843
        %v845 = vpop.f32.mrb[0].mxu0
        %v846 = vpop.f32.mrb[0].mxu0
        %v847 = vadd.f32 %v266, %v846
        %v848 = vpop.f32.mrb[0].mxu0
        %849 = vmatprep.mubr.bf16.mxu0 0
        %850 = vmatmul.mubr.bf16.gmra.mrb[0].mxu0 %v760
        %v851 = vpop.f32.mrb[0].mxu0
        %v852 = vadd.f32 %v266, %v851
        %v853 = vpop.f32.mrb[0].mxu0
        %v854 = vpop.f32.mrb[0].mxu0
        %v855 = vadd.f32 %v266, %v854
        %v856 = vpop.f32.mrb[0].mxu0
        %857 = vmatprep.mubr.bf16.mxu0 0
        %858 = vmatmul.mubr.bf16.gmra.mrb[0].mxu0 %v763
        %v859 = vpop.f32.mrb[0].mxu0
        %v860 = vadd.f32 %v266, %v859
        %v861 = vpop.f32.mrb[0].mxu0
        %v862 = vpop.f32.mrb[0].mxu0
        %v863 = vadd.f32 %v266, %v862
        %v864 = vpop.f32.mrb[0].mxu0
        %865 = vmatprep.mubr.bf16.mxu0 0
        %866 = vmatmul.mubr.bf16.gmra.mrb[0].mxu0 %v766
        %v867 = vpop.f32.mrb[0].mxu0
        %v868 = vadd.f32 %v266, %v867
        %v869 = vpop.f32.mrb[0].mxu0
        %v870 = vpop.f32.mrb[0].mxu0
        %v871 = vadd.f32 %v266, %v870
        %v872 = vpop.f32.mrb[0].mxu0
        %873 = vmatprep.mubr.bf16.mxu0 0
        %874 = vmatmul.mubr.bf16.gmra.mrb[0].mxu0 %v769
        %v875 = vpop.f32.mrb[0].mxu0
        %v876 = vadd.f32 %v266, %v875
        %v877 = vpop.f32.mrb[0].mxu0
        %v878 = vpop.f32.mrb[0].mxu0
        %v879 = vadd.f32 %v266, %v878
        %v880 = vpop.f32.mrb[0].mxu0
        %881 = vmatprep.mubr.bf16.mxu0 0
        %882 = vmatmul.mubr.bf16.gmra.mrb[0].mxu0 %v772
        %v883 = vpop.f32.mrb[0].mxu0
        %v884 = vadd.f32 %v266, %v883
        %v885 = vpop.f32.mrb[0].mxu0
        %v886 = vpop.f32.mrb[0].mxu0
        %v887 = vadd.f32 %v266, %v886
        %v888 = vpop.f32.mrb[0].mxu0
        %889 = vmatprep.mubr.bf16.mxu0 0
        %890 = vmatmul.mubr.bf16.gmra.mrb[0].mxu0 %v775
        %v891 = vpop.f32.mrb[0].mxu0
        %v892 = vadd.f32 %v266, %v891
        %v893 = vpop.f32.mrb[0].mxu0
        %v894 = vpop.f32.mrb[0].mxu0
        %v895 = vadd.f32 %v266, %v894
        %v896 = vpop.f32.mrb[0].mxu0
        %897 = vmatprep.mubr.bf16.mxu0 0
        %898 = vmatmul.mubr.bf16.gmra.mrb[0].mxu0 %v778
        %v899 = vpop.f32.mrb[0].mxu0
        %v900 = vadd.f32 %v266, %v899
        %v901 = vpop.f32.mrb[0].mxu0
        %v902 = vpop.f32.mrb[0].mxu0
        %v903 = vadd.f32 %v266, %v902
        %v904 = vpop.f32.mrb[0].mxu0
        %905 = vmatprep.mubr.bf16.mxu0 0
        %906 = vmatmul.mubr.bf16.gmra.mrb[0].mxu0 %v781
        %v907 = vpop.f32.mrb[0].mxu0
        %v908 = vadd.f32 %v266, %v907
        %v909 = vpop.f32.mrb[0].mxu0
        %v910 = vpop.f32.mrb[0].mxu0
        %v911 = vadd.f32 %v266, %v910
        %v912 = vpop.f32.mrb[0].mxu0
        %913 = vmatprep.mubr.bf16.mxu0 0
        %914 = vmatmul.mubr.bf16.gmra.mrb[0].mxu0 %v784
        %v915 = vpop.f32.mrb[0].mxu0
        %v916 = vadd.f32 %v266, %v915
        %v917 = vpop.f32.mrb[0].mxu0
        %v918 = vpop.f32.mrb[0].mxu0
        %v919 = vadd.f32 %v266, %v918
        %v920 = vpop.f32.mrb[0].mxu0
        %921 = vmatprep.mubr.bf16.mxu0 0
        %922 = vmatmul.mubr.bf16.gmra.mrb[0].mxu0 %v787
        %v923 = vpop.f32.mrb[0].mxu0
        %v924 = vadd.f32 %v266, %v923
        %v925 = vpop.f32.mrb[0].mxu0
        %v926 = vpop.f32.mrb[0].mxu0
        %v927 = vadd.f32 %v266, %v926
        %v928 = vpop.f32.mrb[0].mxu0
        %929 = vmatprep.mubr.bf16.mxu0 0
        %930 = vmatmul.mubr.bf16.gmra.mrb[0].mxu0 %v790
        %v931 = vpop.f32.mrb[0].mxu0
        %v932 = vadd.f32 %v266, %v931
        %v933 = vpop.f32.mrb[0].mxu0
        %v934 = vpop.f32.mrb[0].mxu0
        %v935 = vadd.f32 %v266, %v934
        %v936 = vpop.f32.mrb[0].mxu0
        %937 = vmatprep.mubr.bf16.mxu0 0
        %938 = vmatmul.mubr.bf16.gmra.mrb[0].mxu0 %v793
        %v939 = vpop.f32.mrb[0].mxu0
        %v940 = vadd.f32 %v266, %v939
        %v941 = vpop.f32.mrb[0].mxu0
        %v942 = vpop.f32.mrb[0].mxu0
        %v943 = vadd.f32 %v266, %v942
        %v944 = vpop.f32.mrb[0].mxu0
        %945 = vmatprep.mubr.bf16.mxu0 0
        %946 = vmatmul.mubr.bf16.gmra.mrb[0].mxu0 %v796
        %v947 = vpop.f32.mrb[0].mxu0
        %v948 = vadd.f32 %v266, %v947
        %v949 = vpop.f32.mrb[0].mxu0
        %v950 = vpop.f32.mrb[0].mxu0
        %v951 = vadd.f32 %v266, %v950
        %v952 = vpop.f32.mrb[0].mxu0
        %953 = vmatprep.mubr.bf16.mxu0 0
        %954 = vmatmul.mubr.bf16.gmra.mrb[0].mxu0 %v799
        %v955 = vpop.f32.mrb[0].mxu0
        %v956 = vadd.f32 %v266, %v955
        %v957 = vpop.f32.mrb[0].mxu0
        %v958 = vpop.f32.mrb[0].mxu0
        %v959 = vadd.f32 %v266, %v958
        %v960 = vpop.f32.mrb[0].mxu0
        %961 = vdwg.mxu0
        %v962 = vmax.f32 %v836, 0.0
        %v963 = vmax.f32 %v839, 0.0
        %v964 = vmax.f32 %v844, 0.0
        %v965 = vmax.f32 %v847, 0.0
        %v966 = vmax.f32 %v852, 0.0
        %v967 = vmax.f32 %v855, 0.0
        %v968 = vmax.f32 %v860, 0.0
        %v969 = vmax.f32 %v863, 0.0
        %v970 = vmax.f32 %v868, 0.0
        %v971 = vmax.f32 %v871, 0.0
        %v972 = vmax.f32 %v876, 0.0
        %v973 = vmax.f32 %v879, 0.0
        %v974 = vmax.f32 %v884, 0.0
        %v975 = vmax.f32 %v887, 0.0
        %v976 = vmax.f32 %v892, 0.0
        %v977 = vmax.f32 %v895, 0.0
        %v978 = vmax.f32 %v900, 0.0
        %v979 = vmax.f32 %v903, 0.0
        %v980 = vmax.f32 %v908, 0.0
        %v981 = vmax.f32 %v911, 0.0
        %v982 = vmax.f32 %v916, 0.0
        %v983 = vmax.f32 %v919, 0.0
        %v984 = vmax.f32 %v924, 0.0
        %v985 = vmax.f32 %v927, 0.0
        %v986 = vmax.f32 %v932, 0.0
        %v987 = vmax.f32 %v935, 0.0
        %v988 = vmax.f32 %v940, 0.0
        %v989 = vmax.f32 %v943, 0.0
        %v990 = vmax.f32 %v948, 0.0
        %v991 = vmax.f32 %v951, 0.0
        %v992 = vmax.f32 %v956, 0.0
        %v993 = vmax.f32 %v959, 0.0
        %v994 = vadd.f32 %v962, %v963
        %v995 = vadd.f32 %v994, %v964
        %v996 = vadd.f32 %v995, %v965
        %v997 = vadd.f32 %v996, %v966
        %v998 = vadd.f32 %v997, %v967
        %v999 = vadd.f32 %v998, %v968
        %v1000 = vadd.f32 %v999, %v969
        %v1001 = vadd.f32 %v1000, %v970
        %v1002 = vadd.f32 %v1001, %v971
        %v1003 = vadd.f32 %v1002, %v972
        %v1004 = vadd.f32 %v1003, %v973
        %v1005 = vadd.f32 %v1004, %v974
        %v1006 = vadd.f32 %v1005, %v975
        %v1007 = vadd.f32 %v1006, %v976
        %v1008 = vadd.f32 %v1007, %v977
        %v1009 = vadd.f32 %v1008, %v978
        %v1010 = vadd.f32 %v1009, %v979
        %v1011 = vadd.f32 %v1010, %v980
        %v1012 = vadd.f32 %v1011, %v981
        %v1013 = vadd.f32 %v1012, %v982
        %v1014 = vadd.f32 %v1013, %v983
        %v1015 = vadd.f32 %v1014, %v984
        %v1016 = vadd.f32 %v1015, %v985
        %v1017 = vadd.f32 %v1016, %v986
        %v1018 = vadd.f32 %v1017, %v987
        %v1019 = vadd.f32 %v1018, %v988
        %v1020 = vadd.f32 %v1019, %v989
        %v1021 = vadd.f32 %v1020, %v990
        %v1022 = vadd.f32 %v1021, %v991
        %v1023 = vadd.f32 %v1022, %v992
        %v1024 = vadd.f32 %v1023, %v993
        %v1025 = vrot.slane %v1024, 4
        %v1026 = vadd.f32 %v1024, %v1025
        %v1027 = vrot.slane %v1026, 2
        %v1028 = vadd.f32 %v1026, %v1027
        %v1029 = vrot.slane %v1028, 1
        %v1030 = vadd.f32 %v1028, %v1029
        %v1031 = vadd.f32 %v639, %v1030
        %s1032 = scalar_lea.vmem %s222, 256
        %v1033 = vld [vmem:[%s1032] sm:$0xf]
        %v1034 = vld [vmem:[%s1032 + $0x4] sm:$0xf]
        %v1035 = vld [vmem:[%s1032 + $0x8] sm:$0xf]
        %v1036 = vld [vmem:[%s1032 + $0xc] sm:$0xf]
        %v1037 = vld [vmem:[%s1032 + $0x10] sm:$0xf]
        %v1038 = vld [vmem:[%s1032 + $0x14] sm:$0xf]
        %v1039 = vld [vmem:[%s1032 + $0x18] sm:$0xf]
        %v1040 = vld [vmem:[%s1032 + $0x1c] sm:$0xf]
        %v1041 = vld [vmem:[%s1032 + $0x20] sm:$0xf]
        %v1042 = vld [vmem:[%s1032 + $0x24] sm:$0xf]
        %v1043 = vld [vmem:[%s1032 + $0x28] sm:$0xf]
        %v1044 = vld [vmem:[%s1032 + $0x2c] sm:$0xf]
        %v1045 = vld [vmem:[%s1032 + $0x30] sm:$0xf]
        %v1046 = vld [vmem:[%s1032 + $0x34] sm:$0xf]
        %v1047 = vld [vmem:[%s1032 + $0x38] sm:$0xf]
        %v1048 = vld [vmem:[%s1032 + $0x3c] sm:$0xf]
        %v1049 = vld [vmem:[%s1032 + $0x40] sm:$0xf]
        %v1050 = vld [vmem:[%s1032 + $0x44] sm:$0xf]
        %v1051 = vld [vmem:[%s1032 + $0x48] sm:$0xf]
        %v1052 = vld [vmem:[%s1032 + $0x4c] sm:$0xf]
        %v1053 = vld [vmem:[%s1032 + $0x50] sm:$0xf]
        %v1054 = vld [vmem:[%s1032 + $0x54] sm:$0xf]
        %v1055 = vld [vmem:[%s1032 + $0x58] sm:$0xf]
        %v1056 = vld [vmem:[%s1032 + $0x5c] sm:$0xf]
        %v1057 = vld [vmem:[%s1032 + $0x60] sm:$0xf]
        %v1058 = vld [vmem:[%s1032 + $0x64] sm:$0xf]
        %v1059 = vld [vmem:[%s1032 + $0x68] sm:$0xf]
        %v1060 = vld [vmem:[%s1032 + $0x6c] sm:$0xf]
        %v1061 = vld [vmem:[%s1032 + $0x70] sm:$0xf]
        %v1062 = vld [vmem:[%s1032 + $0x74] sm:$0xf]
        %v1063 = vld [vmem:[%s1032 + $0x78] sm:$0xf]
        %v1064 = vld [vmem:[%s1032 + $0x7c] sm:$0xf]
        %v1097 = vunpack.c.l.b16 %v1033
        %v1098 = vunpack.c.l.b16 %v1034
        %v1099 = vunpack.c.l.b16 %v1035
        %v1100 = vunpack.c.l.b16 %v1036
        %v1101 = vunpack.c.l.b16 %v1037
        %v1102 = vunpack.c.l.b16 %v1038
        %v1103 = vunpack.c.l.b16 %v1039
        %v1104 = vunpack.c.l.b16 %v1040
        %v1105 = vunpack.c.l.b16 %v1041
        %v1106 = vunpack.c.l.b16 %v1042
        %v1107 = vunpack.c.l.b16 %v1043
        %v1108 = vunpack.c.l.b16 %v1044
        %v1109 = vunpack.c.l.b16 %v1045
        %v1110 = vunpack.c.l.b16 %v1046
        %v1111 = vunpack.c.l.b16 %v1047
        %v1112 = vunpack.c.l.b16 %v1048
        %v1113 = vunpack.c.l.b16 %v1049
        %v1114 = vunpack.c.l.b16 %v1050
        %v1115 = vunpack.c.l.b16 %v1051
        %v1116 = vunpack.c.l.b16 %v1052
        %v1117 = vunpack.c.l.b16 %v1053
        %v1118 = vunpack.c.l.b16 %v1054
        %v1119 = vunpack.c.l.b16 %v1055
        %v1120 = vunpack.c.l.b16 %v1056
        %v1121 = vunpack.c.l.b16 %v1057
        %v1122 = vunpack.c.l.b16 %v1058
        %v1123 = vunpack.c.l.b16 %v1059
        %v1124 = vunpack.c.l.b16 %v1060
        %v1125 = vunpack.c.l.b16 %v1061
        %v1126 = vunpack.c.l.b16 %v1062
        %v1127 = vunpack.c.l.b16 %v1063
        %v1128 = vunpack.c.l.b16 %v1064
        %v1129 = vpack.c.b16 %v1098, %v1097
        %v1130 = vpack.c.b16 %v1100, %v1099
        %v1131 = vpack.c.b16 %v1102, %v1101
        %v1132 = vpack.c.b16 %v1104, %v1103
        %v1133 = vpack.c.b16 %v1106, %v1105
        %v1134 = vpack.c.b16 %v1108, %v1107
        %v1135 = vpack.c.b16 %v1110, %v1109
        %v1136 = vpack.c.b16 %v1112, %v1111
        %v1137 = vpack.c.b16 %v1114, %v1113
        %v1138 = vpack.c.b16 %v1116, %v1115
        %v1139 = vpack.c.b16 %v1118, %v1117
        %v1140 = vpack.c.b16 %v1120, %v1119
        %v1141 = vpack.c.b16 %v1122, %v1121
        %v1142 = vpack.c.b16 %v1124, %v1123
        %v1143 = vpack.c.b16 %v1126, %v1125
        %v1144 = vpack.c.b16 %v1128, %v1127
        %v1146 = vsel %vm360, %v1129, 0
        %v1149 = vsel %vm360, %v1130, 0
        %v1152 = vsel %vm360, %v1131, 0
        %v1155 = vsel %vm360, %v1132, 0
        %v1158 = vsel %vm360, %v1133, 0
        %v1161 = vsel %vm360, %v1134, 0
        %v1164 = vsel %vm360, %v1135, 0
        %v1167 = vsel %vm360, %v1136, 0
        %v1170 = vsel %vm360, %v1137, 0
        %v1173 = vsel %vm360, %v1138, 0
        %v1176 = vsel %vm360, %v1139, 0
        %v1179 = vsel %vm360, %v1140, 0
        %v1182 = vsel %vm360, %v1141, 0
        %v1185 = vsel %vm360, %v1142, 0
        %v1188 = vsel %vm360, %v1143, 0
        %v1191 = vsel %vm360, %v1144, 0
        %1193 = vmatprep.subr.bf16.mxu0 0
        %1194 = vmatpush1.bf16.msra.mxu0 %v356
        %1195 = vmatprep.subr.bf16.mxu0 0
        %1196 = vmatpush1.bf16.msra.mxu0 %v357
        %1197 = vmatprep.subr.bf16.mxu0 0
        %1198 = vmatpush1.bf16.msra.mxu0 0
        %1199 = vmatprep.subr.bf16.mxu0 0
        %1200 = vmatpush1.bf16.msra.mxu0 0
        %1201 = vmatprep.subr.bf16.mxu0 0
        %1202 = vmatpush1.bf16.msra.mxu0 0
        %1203 = vmatprep.subr.bf16.mxu0 0
        %1204 = vmatpush1.bf16.msra.mxu0 0
        %1205 = vmatprep.subr.bf16.mxu0 0
        %1206 = vmatpush1.bf16.msra.mxu0 0
        %1207 = vmatprep.subr.bf16.mxu0 0
        %1208 = vmatpush1.bf16.msra.mxu0 0
        %1209 = vmatprep.subr.bf16.mxu0 0
        %1210 = vmatpush1.bf16.msra.mxu0 0
        %1211 = vmatprep.subr.bf16.mxu0 0
        %1212 = vmatpush1.bf16.msra.mxu0 0
        %1213 = vmatprep.subr.bf16.mxu0 0
        %1214 = vmatpush1.bf16.msra.mxu0 0
        %1215 = vmatprep.subr.bf16.mxu0 0
        %1216 = vmatpush1.bf16.msra.mxu0 0
        %1217 = vmatprep.subr.bf16.mxu0 0
        %1218 = vmatpush1.bf16.msra.mxu0 0
        %1219 = vmatprep.subr.bf16.mxu0 0
        %1220 = vmatpush1.bf16.msra.mxu0 0
        %1221 = vmatprep.subr.bf16.mxu0 0
        %1222 = vmatpush1.bf16.msra.mxu0 0
        %1223 = vmatprep.subr.bf16.mxu0 0
        %1224 = vmatpush1.bf16.msra.mxu0 0
        %1225 = vmatprep.mubr.bf16.mxu0 0
        %1226 = vmatmul.mubr.bf16.gmra.mrb[0].mxu0 %v1146
        %v1227 = vpop.f32.mrb[0].mxu0
        %v1228 = vadd.f32 %v266, %v1227
        %v1229 = vpop.f32.mrb[0].mxu0
        %v1230 = vpop.f32.mrb[0].mxu0
        %v1231 = vadd.f32 %v266, %v1230
        %v1232 = vpop.f32.mrb[0].mxu0
        %1233 = vmatprep.mubr.bf16.mxu0 0
        %1234 = vmatmul.mubr.bf16.gmra.mrb[0].mxu0 %v1149
        %v1235 = vpop.f32.mrb[0].mxu0
        %v1236 = vadd.f32 %v266, %v1235
        %v1237 = vpop.f32.mrb[0].mxu0
        %v1238 = vpop.f32.mrb[0].mxu0
        %v1239 = vadd.f32 %v266, %v1238
        %v1240 = vpop.f32.mrb[0].mxu0
        %1241 = vmatprep.mubr.bf16.mxu0 0
        %1242 = vmatmul.mubr.bf16.gmra.mrb[0].mxu0 %v1152
        %v1243 = vpop.f32.mrb[0].mxu0
        %v1244 = vadd.f32 %v266, %v1243
        %v1245 = vpop.f32.mrb[0].mxu0
        %v1246 = vpop.f32.mrb[0].mxu0
        %v1247 = vadd.f32 %v266, %v1246
        %v1248 = vpop.f32.mrb[0].mxu0
        %1249 = vmatprep.mubr.bf16.mxu0 0
        %1250 = vmatmul.mubr.bf16.gmra.mrb[0].mxu0 %v1155
        %v1251 = vpop.f32.mrb[0].mxu0
        %v1252 = vadd.f32 %v266, %v1251
        %v1253 = vpop.f32.mrb[0].mxu0
        %v1254 = vpop.f32.mrb[0].mxu0
        %v1255 = vadd.f32 %v266, %v1254
        %v1256 = vpop.f32.mrb[0].mxu0
        %1257 = vmatprep.mubr.bf16.mxu0 0
        %1258 = vmatmul.mubr.bf16.gmra.mrb[0].mxu0 %v1158
        %v1259 = vpop.f32.mrb[0].mxu0
        %v1260 = vadd.f32 %v266, %v1259
        %v1261 = vpop.f32.mrb[0].mxu0
        %v1262 = vpop.f32.mrb[0].mxu0
        %v1263 = vadd.f32 %v266, %v1262
        %v1264 = vpop.f32.mrb[0].mxu0
        %1265 = vmatprep.mubr.bf16.mxu0 0
        %1266 = vmatmul.mubr.bf16.gmra.mrb[0].mxu0 %v1161
        %v1267 = vpop.f32.mrb[0].mxu0
        %v1268 = vadd.f32 %v266, %v1267
        %v1269 = vpop.f32.mrb[0].mxu0
        %v1270 = vpop.f32.mrb[0].mxu0
        %v1271 = vadd.f32 %v266, %v1270
        %v1272 = vpop.f32.mrb[0].mxu0
        %1273 = vmatprep.mubr.bf16.mxu0 0
        %1274 = vmatmul.mubr.bf16.gmra.mrb[0].mxu0 %v1164
        %v1275 = vpop.f32.mrb[0].mxu0
        %v1276 = vadd.f32 %v266, %v1275
        %v1277 = vpop.f32.mrb[0].mxu0
        %v1278 = vpop.f32.mrb[0].mxu0
        %v1279 = vadd.f32 %v266, %v1278
        %v1280 = vpop.f32.mrb[0].mxu0
        %1281 = vmatprep.mubr.bf16.mxu0 0
        %1282 = vmatmul.mubr.bf16.gmra.mrb[0].mxu0 %v1167
        %v1283 = vpop.f32.mrb[0].mxu0
        %v1284 = vadd.f32 %v266, %v1283
        %v1285 = vpop.f32.mrb[0].mxu0
        %v1286 = vpop.f32.mrb[0].mxu0
        %v1287 = vadd.f32 %v266, %v1286
        %v1288 = vpop.f32.mrb[0].mxu0
        %1289 = vmatprep.mubr.bf16.mxu0 0
        %1290 = vmatmul.mubr.bf16.gmra.mrb[0].mxu0 %v1170
        %v1291 = vpop.f32.mrb[0].mxu0
        %v1292 = vadd.f32 %v266, %v1291
        %v1293 = vpop.f32.mrb[0].mxu0
        %v1294 = vpop.f32.mrb[0].mxu0
        %v1295 = vadd.f32 %v266, %v1294
        %v1296 = vpop.f32.mrb[0].mxu0
        %1297 = vmatprep.mubr.bf16.mxu0 0
        %1298 = vmatmul.mubr.bf16.gmra.mrb[0].mxu0 %v1173
        %v1299 = vpop.f32.mrb[0].mxu0
        %v1300 = vadd.f32 %v266, %v1299
        %v1301 = vpop.f32.mrb[0].mxu0
        %v1302 = vpop.f32.mrb[0].mxu0
        %v1303 = vadd.f32 %v266, %v1302
        %v1304 = vpop.f32.mrb[0].mxu0
        %1305 = vmatprep.mubr.bf16.mxu0 0
        %1306 = vmatmul.mubr.bf16.gmra.mrb[0].mxu0 %v1176
        %v1307 = vpop.f32.mrb[0].mxu0
        %v1308 = vadd.f32 %v266, %v1307
        %v1309 = vpop.f32.mrb[0].mxu0
        %v1310 = vpop.f32.mrb[0].mxu0
        %v1311 = vadd.f32 %v266, %v1310
        %v1312 = vpop.f32.mrb[0].mxu0
        %1313 = vmatprep.mubr.bf16.mxu0 0
        %1314 = vmatmul.mubr.bf16.gmra.mrb[0].mxu0 %v1179
        %v1315 = vpop.f32.mrb[0].mxu0
        %v1316 = vadd.f32 %v266, %v1315
        %v1317 = vpop.f32.mrb[0].mxu0
        %v1318 = vpop.f32.mrb[0].mxu0
        %v1319 = vadd.f32 %v266, %v1318
        %v1320 = vpop.f32.mrb[0].mxu0
        %1321 = vmatprep.mubr.bf16.mxu0 0
        %1322 = vmatmul.mubr.bf16.gmra.mrb[0].mxu0 %v1182
        %v1323 = vpop.f32.mrb[0].mxu0
        %v1324 = vadd.f32 %v266, %v1323
        %v1325 = vpop.f32.mrb[0].mxu0
        %v1326 = vpop.f32.mrb[0].mxu0
        %v1327 = vadd.f32 %v266, %v1326
        %v1328 = vpop.f32.mrb[0].mxu0
        %1329 = vmatprep.mubr.bf16.mxu0 0
        %1330 = vmatmul.mubr.bf16.gmra.mrb[0].mxu0 %v1185
        %v1331 = vpop.f32.mrb[0].mxu0
        %v1332 = vadd.f32 %v266, %v1331
        %v1333 = vpop.f32.mrb[0].mxu0
        %v1334 = vpop.f32.mrb[0].mxu0
        %v1335 = vadd.f32 %v266, %v1334
        %v1336 = vpop.f32.mrb[0].mxu0
        %1337 = vmatprep.mubr.bf16.mxu0 0
        %1338 = vmatmul.mubr.bf16.gmra.mrb[0].mxu0 %v1188
        %v1339 = vpop.f32.mrb[0].mxu0
        %v1340 = vadd.f32 %v266, %v1339
        %v1341 = vpop.f32.mrb[0].mxu0
        %v1342 = vpop.f32.mrb[0].mxu0
        %v1343 = vadd.f32 %v266, %v1342
        %v1344 = vpop.f32.mrb[0].mxu0
        %1345 = vmatprep.mubr.bf16.mxu0 0
        %1346 = vmatmul.mubr.bf16.gmra.mrb[0].mxu0 %v1191
        %v1347 = vpop.f32.mrb[0].mxu0
        %v1348 = vadd.f32 %v266, %v1347
        %v1349 = vpop.f32.mrb[0].mxu0
        %v1350 = vpop.f32.mrb[0].mxu0
        %v1351 = vadd.f32 %v266, %v1350
        %v1352 = vpop.f32.mrb[0].mxu0
        %1353 = vdwg.mxu0
        %v1354 = vmax.f32 %v1228, 0.0
        %v1355 = vmax.f32 %v1231, 0.0
        %v1356 = vmax.f32 %v1236, 0.0
        %v1357 = vmax.f32 %v1239, 0.0
        %v1358 = vmax.f32 %v1244, 0.0
        %v1359 = vmax.f32 %v1247, 0.0
        %v1360 = vmax.f32 %v1252, 0.0
        %v1361 = vmax.f32 %v1255, 0.0
        %v1362 = vmax.f32 %v1260, 0.0
        %v1363 = vmax.f32 %v1263, 0.0
        %v1364 = vmax.f32 %v1268, 0.0
        %v1365 = vmax.f32 %v1271, 0.0
        %v1366 = vmax.f32 %v1276, 0.0
        %v1367 = vmax.f32 %v1279, 0.0
        %v1368 = vmax.f32 %v1284, 0.0
        %v1369 = vmax.f32 %v1287, 0.0
        %v1370 = vmax.f32 %v1292, 0.0
        %v1371 = vmax.f32 %v1295, 0.0
        %v1372 = vmax.f32 %v1300, 0.0
        %v1373 = vmax.f32 %v1303, 0.0
        %v1374 = vmax.f32 %v1308, 0.0
        %v1375 = vmax.f32 %v1311, 0.0
        %v1376 = vmax.f32 %v1316, 0.0
        %v1377 = vmax.f32 %v1319, 0.0
        %v1378 = vmax.f32 %v1324, 0.0
        %v1379 = vmax.f32 %v1327, 0.0
        %v1380 = vmax.f32 %v1332, 0.0
        %v1381 = vmax.f32 %v1335, 0.0
        %v1382 = vmax.f32 %v1340, 0.0
        %v1383 = vmax.f32 %v1343, 0.0
        %v1384 = vmax.f32 %v1348, 0.0
        %v1385 = vmax.f32 %v1351, 0.0
        %v1386 = vadd.f32 %v1354, %v1355
        %v1387 = vadd.f32 %v1386, %v1356
        %v1388 = vadd.f32 %v1387, %v1357
        %v1389 = vadd.f32 %v1388, %v1358
        %v1390 = vadd.f32 %v1389, %v1359
        %v1391 = vadd.f32 %v1390, %v1360
        %v1392 = vadd.f32 %v1391, %v1361
        %v1393 = vadd.f32 %v1392, %v1362
        %v1394 = vadd.f32 %v1393, %v1363
        %v1395 = vadd.f32 %v1394, %v1364
        %v1396 = vadd.f32 %v1395, %v1365
        %v1397 = vadd.f32 %v1396, %v1366
        %v1398 = vadd.f32 %v1397, %v1367
        %v1399 = vadd.f32 %v1398, %v1368
        %v1400 = vadd.f32 %v1399, %v1369
        %v1401 = vadd.f32 %v1400, %v1370
        %v1402 = vadd.f32 %v1401, %v1371
        %v1403 = vadd.f32 %v1402, %v1372
        %v1404 = vadd.f32 %v1403, %v1373
        %v1405 = vadd.f32 %v1404, %v1374
        %v1406 = vadd.f32 %v1405, %v1375
        %v1407 = vadd.f32 %v1406, %v1376
        %v1408 = vadd.f32 %v1407, %v1377
        %v1409 = vadd.f32 %v1408, %v1378
        %v1410 = vadd.f32 %v1409, %v1379
        %v1411 = vadd.f32 %v1410, %v1380
        %v1412 = vadd.f32 %v1411, %v1381
        %v1413 = vadd.f32 %v1412, %v1382
        %v1414 = vadd.f32 %v1413, %v1383
        %v1415 = vadd.f32 %v1414, %v1384
        %v1416 = vadd.f32 %v1415, %v1385
        %v1417 = vrot.slane %v1416, 4
        %v1418 = vadd.f32 %v1416, %v1417
        %v1419 = vrot.slane %v1418, 2
        %v1420 = vadd.f32 %v1418, %v1419
        %v1421 = vrot.slane %v1420, 1
        %v1422 = vadd.f32 %v1420, %v1421
        %v1423 = vadd.f32 %v1031, %v1422
        %s1424 = scalar_lea.vmem %s222, 384
        %v1425 = vld [vmem:[%s1424] sm:$0xf]
        %v1426 = vld [vmem:[%s1424 + $0x4] sm:$0xf]
        %v1427 = vld [vmem:[%s1424 + $0x8] sm:$0xf]
        %v1428 = vld [vmem:[%s1424 + $0xc] sm:$0xf]
        %v1429 = vld [vmem:[%s1424 + $0x10] sm:$0xf]
        %v1430 = vld [vmem:[%s1424 + $0x14] sm:$0xf]
        %v1431 = vld [vmem:[%s1424 + $0x18] sm:$0xf]
        %v1432 = vld [vmem:[%s1424 + $0x1c] sm:$0xf]
        %v1433 = vld [vmem:[%s1424 + $0x20] sm:$0xf]
        %v1434 = vld [vmem:[%s1424 + $0x24] sm:$0xf]
        %v1435 = vld [vmem:[%s1424 + $0x28] sm:$0xf]
        %v1436 = vld [vmem:[%s1424 + $0x2c] sm:$0xf]
        %v1437 = vld [vmem:[%s1424 + $0x30] sm:$0xf]
        %v1438 = vld [vmem:[%s1424 + $0x34] sm:$0xf]
        %v1439 = vld [vmem:[%s1424 + $0x38] sm:$0xf]
        %v1440 = vld [vmem:[%s1424 + $0x3c] sm:$0xf]
        %v1441 = vld [vmem:[%s1424 + $0x40] sm:$0xf]
        %v1442 = vld [vmem:[%s1424 + $0x44] sm:$0xf]
        %v1443 = vld [vmem:[%s1424 + $0x48] sm:$0xf]
        %v1444 = vld [vmem:[%s1424 + $0x4c] sm:$0xf]
        %v1445 = vld [vmem:[%s1424 + $0x50] sm:$0xf]
        %v1446 = vld [vmem:[%s1424 + $0x54] sm:$0xf]
        %v1447 = vld [vmem:[%s1424 + $0x58] sm:$0xf]
        %v1448 = vld [vmem:[%s1424 + $0x5c] sm:$0xf]
        %v1449 = vld [vmem:[%s1424 + $0x60] sm:$0xf]
        %v1450 = vld [vmem:[%s1424 + $0x64] sm:$0xf]
        %v1451 = vld [vmem:[%s1424 + $0x68] sm:$0xf]
        %v1452 = vld [vmem:[%s1424 + $0x6c] sm:$0xf]
        %v1453 = vld [vmem:[%s1424 + $0x70] sm:$0xf]
        %v1454 = vld [vmem:[%s1424 + $0x74] sm:$0xf]
        %v1455 = vld [vmem:[%s1424 + $0x78] sm:$0xf]
        %v1456 = vld [vmem:[%s1424 + $0x7c] sm:$0xf]
        %v1489 = vunpack.c.l.b16 %v1425
        %v1490 = vunpack.c.l.b16 %v1426
        %v1491 = vunpack.c.l.b16 %v1427
        %v1492 = vunpack.c.l.b16 %v1428
        %v1493 = vunpack.c.l.b16 %v1429
        %v1494 = vunpack.c.l.b16 %v1430
        %v1495 = vunpack.c.l.b16 %v1431
        %v1496 = vunpack.c.l.b16 %v1432
        %v1497 = vunpack.c.l.b16 %v1433
        %v1498 = vunpack.c.l.b16 %v1434
        %v1499 = vunpack.c.l.b16 %v1435
        %v1500 = vunpack.c.l.b16 %v1436
        %v1501 = vunpack.c.l.b16 %v1437
        %v1502 = vunpack.c.l.b16 %v1438
        %v1503 = vunpack.c.l.b16 %v1439
        %v1504 = vunpack.c.l.b16 %v1440
        %v1505 = vunpack.c.l.b16 %v1441
        %v1506 = vunpack.c.l.b16 %v1442
        %v1507 = vunpack.c.l.b16 %v1443
        %v1508 = vunpack.c.l.b16 %v1444
        %v1509 = vunpack.c.l.b16 %v1445
        %v1510 = vunpack.c.l.b16 %v1446
        %v1511 = vunpack.c.l.b16 %v1447
        %v1512 = vunpack.c.l.b16 %v1448
        %v1513 = vunpack.c.l.b16 %v1449
        %v1514 = vunpack.c.l.b16 %v1450
        %v1515 = vunpack.c.l.b16 %v1451
        %v1516 = vunpack.c.l.b16 %v1452
        %v1517 = vunpack.c.l.b16 %v1453
        %v1518 = vunpack.c.l.b16 %v1454
        %v1519 = vunpack.c.l.b16 %v1455
        %v1520 = vunpack.c.l.b16 %v1456
        %v1521 = vpack.c.b16 %v1490, %v1489
        %v1522 = vpack.c.b16 %v1492, %v1491
        %v1523 = vpack.c.b16 %v1494, %v1493
        %v1524 = vpack.c.b16 %v1496, %v1495
        %v1525 = vpack.c.b16 %v1498, %v1497
        %v1526 = vpack.c.b16 %v1500, %v1499
        %v1527 = vpack.c.b16 %v1502, %v1501
        %v1528 = vpack.c.b16 %v1504, %v1503
        %v1529 = vpack.c.b16 %v1506, %v1505
        %v1530 = vpack.c.b16 %v1508, %v1507
        %v1531 = vpack.c.b16 %v1510, %v1509
        %v1532 = vpack.c.b16 %v1512, %v1511
        %v1533 = vpack.c.b16 %v1514, %v1513
        %v1534 = vpack.c.b16 %v1516, %v1515
        %v1535 = vpack.c.b16 %v1518, %v1517
        %v1536 = vpack.c.b16 %v1520, %v1519
        %v1538 = vsel %vm360, %v1521, 0
        %v1541 = vsel %vm360, %v1522, 0
        %v1544 = vsel %vm360, %v1523, 0
        %v1547 = vsel %vm360, %v1524, 0
        %v1550 = vsel %vm360, %v1525, 0
        %v1553 = vsel %vm360, %v1526, 0
        %v1556 = vsel %vm360, %v1527, 0
        %v1559 = vsel %vm360, %v1528, 0
        %v1562 = vsel %vm360, %v1529, 0
        %v1565 = vsel %vm360, %v1530, 0
        %v1568 = vsel %vm360, %v1531, 0
        %v1571 = vsel %vm360, %v1532, 0
        %v1574 = vsel %vm360, %v1533, 0
        %v1577 = vsel %vm360, %v1534, 0
        %v1580 = vsel %vm360, %v1535, 0
        %v1583 = vsel %vm360, %v1536, 0
        %1585 = vmatprep.subr.bf16.mxu0 0
        %1586 = vmatpush1.bf16.msra.mxu0 %v356
        %1587 = vmatprep.subr.bf16.mxu0 0
        %1588 = vmatpush1.bf16.msra.mxu0 %v357
        %1589 = vmatprep.subr.bf16.mxu0 0
        %1590 = vmatpush1.bf16.msra.mxu0 0
        %1591 = vmatprep.subr.bf16.mxu0 0
        %1592 = vmatpush1.bf16.msra.mxu0 0
        %1593 = vmatprep.subr.bf16.mxu0 0
        %1594 = vmatpush1.bf16.msra.mxu0 0
        %1595 = vmatprep.subr.bf16.mxu0 0
        %1596 = vmatpush1.bf16.msra.mxu0 0
        %1597 = vmatprep.subr.bf16.mxu0 0
        %1598 = vmatpush1.bf16.msra.mxu0 0
        %1599 = vmatprep.subr.bf16.mxu0 0
        %1600 = vmatpush1.bf16.msra.mxu0 0
        %1601 = vmatprep.subr.bf16.mxu0 0
        %1602 = vmatpush1.bf16.msra.mxu0 0
        %1603 = vmatprep.subr.bf16.mxu0 0
        %1604 = vmatpush1.bf16.msra.mxu0 0
        %1605 = vmatprep.subr.bf16.mxu0 0
        %1606 = vmatpush1.bf16.msra.mxu0 0
        %1607 = vmatprep.subr.bf16.mxu0 0
        %1608 = vmatpush1.bf16.msra.mxu0 0
        %1609 = vmatprep.subr.bf16.mxu0 0
        %1610 = vmatpush1.bf16.msra.mxu0 0
        %1611 = vmatprep.subr.bf16.mxu0 0
        %1612 = vmatpush1.bf16.msra.mxu0 0
        %1613 = vmatprep.subr.bf16.mxu0 0
        %1614 = vmatpush1.bf16.msra.mxu0 0
        %1615 = vmatprep.subr.bf16.mxu0 0
        %1616 = vmatpush1.bf16.msra.mxu0 0
        %1617 = vmatprep.mubr.bf16.mxu0 0
        %1618 = vmatmul.mubr.bf16.gmra.mrb[0].mxu0 %v1538
        %v1619 = vpop.f32.mrb[0].mxu0
        %v1620 = vadd.f32 %v266, %v1619
        %v1621 = vpop.f32.mrb[0].mxu0
        %v1622 = vpop.f32.mrb[0].mxu0
        %v1623 = vadd.f32 %v266, %v1622
        %v1624 = vpop.f32.mrb[0].mxu0
        %1625 = vmatprep.mubr.bf16.mxu0 0
        %1626 = vmatmul.mubr.bf16.gmra.mrb[0].mxu0 %v1541
        %v1627 = vpop.f32.mrb[0].mxu0
        %v1628 = vadd.f32 %v266, %v1627
        %v1629 = vpop.f32.mrb[0].mxu0
        %v1630 = vpop.f32.mrb[0].mxu0
        %v1631 = vadd.f32 %v266, %v1630
        %v1632 = vpop.f32.mrb[0].mxu0
        %1633 = vmatprep.mubr.bf16.mxu0 0
        %1634 = vmatmul.mubr.bf16.gmra.mrb[0].mxu0 %v1544
        %v1635 = vpop.f32.mrb[0].mxu0
        %v1636 = vadd.f32 %v266, %v1635
        %v1637 = vpop.f32.mrb[0].mxu0
        %v1638 = vpop.f32.mrb[0].mxu0
        %v1639 = vadd.f32 %v266, %v1638
        %v1640 = vpop.f32.mrb[0].mxu0
        %1641 = vmatprep.mubr.bf16.mxu0 0
        %1642 = vmatmul.mubr.bf16.gmra.mrb[0].mxu0 %v1547
        %v1643 = vpop.f32.mrb[0].mxu0
        %v1644 = vadd.f32 %v266, %v1643
        %v1645 = vpop.f32.mrb[0].mxu0
        %v1646 = vpop.f32.mrb[0].mxu0
        %v1647 = vadd.f32 %v266, %v1646
        %v1648 = vpop.f32.mrb[0].mxu0
        %1649 = vmatprep.mubr.bf16.mxu0 0
        %1650 = vmatmul.mubr.bf16.gmra.mrb[0].mxu0 %v1550
        %v1651 = vpop.f32.mrb[0].mxu0
        %v1652 = vadd.f32 %v266, %v1651
        %v1653 = vpop.f32.mrb[0].mxu0
        %v1654 = vpop.f32.mrb[0].mxu0
        %v1655 = vadd.f32 %v266, %v1654
        %v1656 = vpop.f32.mrb[0].mxu0
        %1657 = vmatprep.mubr.bf16.mxu0 0
        %1658 = vmatmul.mubr.bf16.gmra.mrb[0].mxu0 %v1553
        %v1659 = vpop.f32.mrb[0].mxu0
        %v1660 = vadd.f32 %v266, %v1659
        %v1661 = vpop.f32.mrb[0].mxu0
        %v1662 = vpop.f32.mrb[0].mxu0
        %v1663 = vadd.f32 %v266, %v1662
        %v1664 = vpop.f32.mrb[0].mxu0
        %1665 = vmatprep.mubr.bf16.mxu0 0
        %1666 = vmatmul.mubr.bf16.gmra.mrb[0].mxu0 %v1556
        %v1667 = vpop.f32.mrb[0].mxu0
        %v1668 = vadd.f32 %v266, %v1667
        %v1669 = vpop.f32.mrb[0].mxu0
        %v1670 = vpop.f32.mrb[0].mxu0
        %v1671 = vadd.f32 %v266, %v1670
        %v1672 = vpop.f32.mrb[0].mxu0
        %1673 = vmatprep.mubr.bf16.mxu0 0
        %1674 = vmatmul.mubr.bf16.gmra.mrb[0].mxu0 %v1559
        %v1675 = vpop.f32.mrb[0].mxu0
        %v1676 = vadd.f32 %v266, %v1675
        %v1677 = vpop.f32.mrb[0].mxu0
        %v1678 = vpop.f32.mrb[0].mxu0
        %v1679 = vadd.f32 %v266, %v1678
        %v1680 = vpop.f32.mrb[0].mxu0
        %1681 = vmatprep.mubr.bf16.mxu0 0
        %1682 = vmatmul.mubr.bf16.gmra.mrb[0].mxu0 %v1562
        %v1683 = vpop.f32.mrb[0].mxu0
        %v1684 = vadd.f32 %v266, %v1683
        %v1685 = vpop.f32.mrb[0].mxu0
        %v1686 = vpop.f32.mrb[0].mxu0
        %v1687 = vadd.f32 %v266, %v1686
        %v1688 = vpop.f32.mrb[0].mxu0
        %1689 = vmatprep.mubr.bf16.mxu0 0
        %1690 = vmatmul.mubr.bf16.gmra.mrb[0].mxu0 %v1565
        %v1691 = vpop.f32.mrb[0].mxu0
        %v1692 = vadd.f32 %v266, %v1691
        %v1693 = vpop.f32.mrb[0].mxu0
        %v1694 = vpop.f32.mrb[0].mxu0
        %v1695 = vadd.f32 %v266, %v1694
        %v1696 = vpop.f32.mrb[0].mxu0
        %1697 = vmatprep.mubr.bf16.mxu0 0
        %1698 = vmatmul.mubr.bf16.gmra.mrb[0].mxu0 %v1568
        %v1699 = vpop.f32.mrb[0].mxu0
        %v1700 = vadd.f32 %v266, %v1699
        %v1701 = vpop.f32.mrb[0].mxu0
        %v1702 = vpop.f32.mrb[0].mxu0
        %v1703 = vadd.f32 %v266, %v1702
        %v1704 = vpop.f32.mrb[0].mxu0
        %1705 = vmatprep.mubr.bf16.mxu0 0
        %1706 = vmatmul.mubr.bf16.gmra.mrb[0].mxu0 %v1571
        %v1707 = vpop.f32.mrb[0].mxu0
        %v1708 = vadd.f32 %v266, %v1707
        %v1709 = vpop.f32.mrb[0].mxu0
        %v1710 = vpop.f32.mrb[0].mxu0
        %v1711 = vadd.f32 %v266, %v1710
        %v1712 = vpop.f32.mrb[0].mxu0
        %1713 = vmatprep.mubr.bf16.mxu0 0
        %1714 = vmatmul.mubr.bf16.gmra.mrb[0].mxu0 %v1574
        %v1715 = vpop.f32.mrb[0].mxu0
        %v1716 = vadd.f32 %v266, %v1715
        %v1717 = vpop.f32.mrb[0].mxu0
        %v1718 = vpop.f32.mrb[0].mxu0
        %v1719 = vadd.f32 %v266, %v1718
        %v1720 = vpop.f32.mrb[0].mxu0
        %1721 = vmatprep.mubr.bf16.mxu0 0
        %1722 = vmatmul.mubr.bf16.gmra.mrb[0].mxu0 %v1577
        %v1723 = vpop.f32.mrb[0].mxu0
        %v1724 = vadd.f32 %v266, %v1723
        %v1725 = vpop.f32.mrb[0].mxu0
        %v1726 = vpop.f32.mrb[0].mxu0
        %v1727 = vadd.f32 %v266, %v1726
        %v1728 = vpop.f32.mrb[0].mxu0
        %1729 = vmatprep.mubr.bf16.mxu0 0
        %1730 = vmatmul.mubr.bf16.gmra.mrb[0].mxu0 %v1580
        %v1731 = vpop.f32.mrb[0].mxu0
        %v1732 = vadd.f32 %v266, %v1731
        %v1733 = vpop.f32.mrb[0].mxu0
        %v1734 = vpop.f32.mrb[0].mxu0
        %v1735 = vadd.f32 %v266, %v1734
        %v1736 = vpop.f32.mrb[0].mxu0
        %1737 = vmatprep.mubr.bf16.mxu0 0
        %1738 = vmatmul.mubr.bf16.gmra.mrb[0].mxu0 %v1583
        %v1739 = vpop.f32.mrb[0].mxu0
        %v1740 = vadd.f32 %v266, %v1739
        %v1741 = vpop.f32.mrb[0].mxu0
        %v1742 = vpop.f32.mrb[0].mxu0
        %v1743 = vadd.f32 %v266, %v1742
        %v1744 = vpop.f32.mrb[0].mxu0
        %1745 = vdwg.mxu0
        %v1746 = vmax.f32 %v1620, 0.0
        %v1747 = vmax.f32 %v1623, 0.0
        %v1748 = vmax.f32 %v1628, 0.0
        %v1749 = vmax.f32 %v1631, 0.0
        %v1750 = vmax.f32 %v1636, 0.0
        %v1751 = vmax.f32 %v1639, 0.0
        %v1752 = vmax.f32 %v1644, 0.0
        %v1753 = vmax.f32 %v1647, 0.0
        %v1754 = vmax.f32 %v1652, 0.0
        %v1755 = vmax.f32 %v1655, 0.0
        %v1756 = vmax.f32 %v1660, 0.0
        %v1757 = vmax.f32 %v1663, 0.0
        %v1758 = vmax.f32 %v1668, 0.0
        %v1759 = vmax.f32 %v1671, 0.0
        %v1760 = vmax.f32 %v1676, 0.0
        %v1761 = vmax.f32 %v1679, 0.0
        %v1762 = vmax.f32 %v1684, 0.0
        %v1763 = vmax.f32 %v1687, 0.0
        %v1764 = vmax.f32 %v1692, 0.0
        %v1765 = vmax.f32 %v1695, 0.0
        %v1766 = vmax.f32 %v1700, 0.0
        %v1767 = vmax.f32 %v1703, 0.0
        %v1768 = vmax.f32 %v1708, 0.0
        %v1769 = vmax.f32 %v1711, 0.0
        %v1770 = vmax.f32 %v1716, 0.0
        %v1771 = vmax.f32 %v1719, 0.0
        %v1772 = vmax.f32 %v1724, 0.0
        %v1773 = vmax.f32 %v1727, 0.0
        %v1774 = vmax.f32 %v1732, 0.0
        %v1775 = vmax.f32 %v1735, 0.0
        %v1776 = vmax.f32 %v1740, 0.0
        %v1777 = vmax.f32 %v1743, 0.0
        %v1778 = vadd.f32 %v1746, %v1747
        %v1779 = vadd.f32 %v1778, %v1748
        %v1780 = vadd.f32 %v1779, %v1749
        %v1781 = vadd.f32 %v1780, %v1750
        %v1782 = vadd.f32 %v1781, %v1751
        %v1783 = vadd.f32 %v1782, %v1752
        %v1784 = vadd.f32 %v1783, %v1753
        %v1785 = vadd.f32 %v1784, %v1754
        %v1786 = vadd.f32 %v1785, %v1755
        %v1787 = vadd.f32 %v1786, %v1756
        %v1788 = vadd.f32 %v1787, %v1757
        %v1789 = vadd.f32 %v1788, %v1758
        %v1790 = vadd.f32 %v1789, %v1759
        %v1791 = vadd.f32 %v1790, %v1760
        %v1792 = vadd.f32 %v1791, %v1761
        %v1793 = vadd.f32 %v1792, %v1762
        %v1794 = vadd.f32 %v1793, %v1763
        %v1795 = vadd.f32 %v1794, %v1764
        %v1796 = vadd.f32 %v1795, %v1765
        %v1797 = vadd.f32 %v1796, %v1766
        %v1798 = vadd.f32 %v1797, %v1767
        %v1799 = vadd.f32 %v1798, %v1768
        %v1800 = vadd.f32 %v1799, %v1769
        %v1801 = vadd.f32 %v1800, %v1770
        %v1802 = vadd.f32 %v1801, %v1771
        %v1803 = vadd.f32 %v1802, %v1772
        %v1804 = vadd.f32 %v1803, %v1773
        %v1805 = vadd.f32 %v1804, %v1774
        %v1806 = vadd.f32 %v1805, %v1775
        %v1807 = vadd.f32 %v1806, %v1776
        %v1808 = vadd.f32 %v1807, %v1777
        %v1809 = vrot.slane %v1808, 4
        %v1810 = vadd.f32 %v1808, %v1809
        %v1811 = vrot.slane %v1810, 2
        %v1812 = vadd.f32 %v1810, %v1811
        %v1813 = vrot.slane %v1812, 1
        %v1814 = vadd.f32 %v1812, %v1813
        %v1815 = vadd.f32 %v1423, %v1814
        %v1816 = vmul.f32 %v1815, 0.0009765625
        %v1817 = vpack.c.bf16 %v1816, %v1816
        %v1818 = vld [vmem:[%s3] sm:$0xf]
        %v1819 = vld [vmem:[%s3 + $0x4] sm:$0xf]
        %v1820 = vld [vmem:[%s3 + $0x8] sm:$0xf]
        %v1821 = vld [vmem:[%s3 + $0xc] sm:$0xf]
        %v1822 = vld [vmem:[%s3 + $0x10] sm:$0xf]
        %v1823 = vld [vmem:[%s3 + $0x14] sm:$0xf]
        %v1824 = vld [vmem:[%s3 + $0x18] sm:$0xf]
        %v1825 = vld [vmem:[%s3 + $0x1c] sm:$0xf]
        %v1826 = vld [vmem:[%s3 + $0x20] sm:$0xf]
        %v1827 = vld [vmem:[%s3 + $0x24] sm:$0xf]
        %v1828 = vld [vmem:[%s3 + $0x28] sm:$0xf]
        %v1829 = vld [vmem:[%s3 + $0x2c] sm:$0xf]
        %v1830 = vld [vmem:[%s3 + $0x30] sm:$0xf]
        %v1831 = vld [vmem:[%s3 + $0x34] sm:$0xf]
        %v1832 = vld [vmem:[%s3 + $0x38] sm:$0xf]
        %v1833 = vld [vmem:[%s3 + $0x3c] sm:$0xf]
        %v1834 = vld [vmem:[%s4] sm:$0x1]
        %v1851 = vunpack.c.l.b16 %v1818
        %v1852 = vunpack.c.l.b16 %v1819
        %v1853 = vunpack.c.l.b16 %v1820
        %v1854 = vunpack.c.l.b16 %v1821
        %v1855 = vunpack.c.l.b16 %v1822
        %v1856 = vunpack.c.l.b16 %v1823
        %v1857 = vunpack.c.l.b16 %v1824
        %v1858 = vunpack.c.l.b16 %v1825
        %v1859 = vunpack.c.l.b16 %v1826
        %v1860 = vunpack.c.l.b16 %v1827
        %v1861 = vunpack.c.l.b16 %v1828
        %v1862 = vunpack.c.l.b16 %v1829
        %v1863 = vunpack.c.l.b16 %v1830
        %v1864 = vunpack.c.l.b16 %v1831
        %v1865 = vunpack.c.l.b16 %v1832
        %v1866 = vunpack.c.l.b16 %v1833
        %v1867 = vpack.c.b16 %v1852, %v1851
        %v1868 = vpack.c.b16 %v1854, %v1853
        %v1869 = vpack.c.b16 %v1856, %v1855
        %v1870 = vpack.c.b16 %v1858, %v1857
        %v1871 = vpack.c.b16 %v1860, %v1859
        %v1872 = vpack.c.b16 %v1862, %v1861
        %v1873 = vpack.c.b16 %v1864, %v1863
        %v1874 = vpack.c.b16 %v1866, %v1865
        %1883 = vmatprep.subr.bf16.mxu0 0
        %1884 = vmatpush1.bf16.msra.mxu0 %v1867
        %1885 = vmatprep.subr.bf16.mxu0 0
        %1886 = vmatpush1.bf16.msra.mxu0 %v1868
        %1887 = vmatprep.subr.bf16.mxu0 0
        %1888 = vmatpush1.bf16.msra.mxu0 %v1869
        %1889 = vmatprep.subr.bf16.mxu0 0
        %1890 = vmatpush1.bf16.msra.mxu0 %v1870
        %1891 = vmatprep.subr.bf16.mxu0 0
        %1892 = vmatpush1.bf16.msra.mxu0 %v1871
        %1893 = vmatprep.subr.bf16.mxu0 0
        %1894 = vmatpush1.bf16.msra.mxu0 %v1872
        %1895 = vmatprep.subr.bf16.mxu0 0
        %1896 = vmatpush1.bf16.msra.mxu0 %v1873
        %1897 = vmatprep.subr.bf16.mxu0 0
        %1898 = vmatpush1.bf16.msra.mxu0 %v1874
        %1899 = vmatprep.subr.bf16.mxu0 0
        %1900 = vmatpush1.bf16.msra.mxu0 0
        %1901 = vmatprep.subr.bf16.mxu0 0
        %1902 = vmatpush1.bf16.msra.mxu0 0
        %1903 = vmatprep.subr.bf16.mxu0 0
        %1904 = vmatpush1.bf16.msra.mxu0 0
        %1905 = vmatprep.subr.bf16.mxu0 0
        %1906 = vmatpush1.bf16.msra.mxu0 0
        %1907 = vmatprep.subr.bf16.mxu0 0
        %1908 = vmatpush1.bf16.msra.mxu0 0
        %1909 = vmatprep.subr.bf16.mxu0 0
        %1910 = vmatpush1.bf16.msra.mxu0 0
        %1911 = vmatprep.subr.bf16.mxu0 0
        %1912 = vmatpush1.bf16.msra.mxu0 0
        %1913 = vmatprep.subr.bf16.mxu0 0
        %1914 = vmatpush1.bf16.msra.mxu0 0
        %1915 = vmatprep.mubr.bf16.mxu0 0
        %1916 = vmatmul.mubr.bf16.gmra.mrb[0].mxu0 %v1817
        %v1917 = vpop.f32.mrb[0].mxu0
        %v1918 = vadd.f32 %v1834, %v1917
        %v1919 = vpop.f32.mrb[0].mxu0
        %v1920 = vpop.f32.mrb[0].mxu0
        %v1921 = vpop.f32.mrb[0].mxu0
        %1922 = vdwg.mxu0
        %1923 = vst [vmem:[%s217] sm:$0x1] %v1918
        %s1924 = sand.u32 %s137, 1
        %s1925 = scalar_lea.sflag [#allocation3], %s1924
        %s1926 = sand.u32 %s137, 1
        %s1927 = scalar_lea.vmem [#allocation2], %s1926
        // Predicated region
        $region41: #{cnn2d_forward.1} parent=39 // pred_check
          %p1928 = pneg %p147
        $region42: #{cnn2d_forward.1} parent=39 // pred_check_branch
          %1930 = sbr.rel (%p1928) target = $region44
        $region43: #{cnn2d_forward.1} parent=39 // pred_region
          %s1932 = ssub.s32 16, 16
          %1933 = vsyncadd %s1925, %s1932
          %s1934 = smul.addr %s19, 16
          %s1935 = scalar_lea.hbm %s5, %s1934
          %s1937 = sshll.u32 %s1927, 4
          %s1938 = int_to_ptr.vmem [resolvable:$true] %s1937
          %1940 = dma.vmem_to_hbm [thread:$0]  %s1938, 16, %s1935, %s1925
        $region44: #{cnn2d_forward.1} parent=39 // pred_fallthru
          _
      $region40: #{cnn2d_forward.1} parent=5 // pred_fallthru
        _
      %p1941 = scmp.le.s32.totalorder 2, %s14
      // Predicated region
      $region45: #{cnn2d_forward.1} parent=5 // pred_check
        %p1942 = pneg %p1941
      $region46: #{cnn2d_forward.1} parent=5 // pred_check_branch
        %1944 = sbr.rel (%p1942) target = $region48
      $region47: #{cnn2d_forward.1} parent=5 // pred_region
        %s1945 = ssub.s32 %s14, 2
        // Predicated region
        $region49: #{cnn2d_forward.1} parent=47 // pred_check
          %p1946 = pneg %p153
        $region50: #{cnn2d_forward.1} parent=47 // pred_check_branch
          %1948 = sbr.rel (%p1946) target = $region52
        $region51: #{cnn2d_forward.1} parent=47 // pred_region
          %s1949 = sand.u32 %s138, 1
          %s1950 = scalar_lea.sflag [#allocation3], %s1949
          %s1951 = sand.u32 %s138, 1
          %s1952 = scalar_lea.vmem [#allocation2], %s1951
          %1953 = dma.done %s1950, 16
        $region52: #{cnn2d_forward.1} parent=47 // pred_fallthru
          _
      $region48: #{cnn2d_forward.1} parent=5 // pred_fallthru
        _
    $region6: #{cnn2d_forward.1} parent=1 // loop_footer
      %s18 = sadd.s32 1, %s14
    $region7: #{cnn2d_forward.1} parent=1 // loop_footer_branch
      %13 = sbr.rel target = $region3
    $region8: #{cnn2d_forward.1} parent=1 // loop_exit
      _
    %1954 = vsyncpa [#allocation3], 1
    %s1955 = scalar_lea.sflag [#allocation3], 1
    %1956 = vsyncpa %s1955, 1

</llo_original>
